<compile_context>
chip_gen: v7x
topology: tpu7x:2x2x1
jax: 0.10.0
libtpu: 0.0.40
codegen_flags: <defaults>
</compile_context>

<pallas_src>
import functools
from typing import NamedTuple

import jax
import jax.numpy as jnp
from jax.experimental import pallas as pl
from jax.experimental.pallas import tpu as pltpu

SH_C0 = 0.28209479177387814  # rgb_to_sh constant


def _round_up(x, m):
    return (x + m - 1) // m * m


def _block_diag(mats):
    """Block-diagonal matrix from a list of 2-D arrays (pure jnp, no scipy)."""
    total_cols = sum(m.shape[1] for m in mats)
    rows, col = [], 0
    for m in mats:
        r, c = m.shape
        rows.append(jnp.concatenate(
            [jnp.zeros((r, col), m.dtype), m,
             jnp.zeros((r, total_cols - col - c), m.dtype)], axis=1))
        col += c
    return jnp.concatenate(rows, axis=0)


def _tile_k(x, k):
    """Lane-wise repeat (avoids jnp.tile's reshape chain inside the kernel)."""
    return jnp.concatenate([x] * k, axis=-1)


# ----------------------------------------------------------------------------
# Pallas kernel
# ----------------------------------------------------------------------------
def decaf_kernel(packed_r, cam_r,
                 wd1_r, bd1_r, wd2_r, bd2_r, wdh_r, bdh_r,
                 ws1_r, bs1_r, ws2_r, bs2_r,
                 out_r, *, E, K, F):
    relu = jax.nn.relu
    bf16 = jnp.bfloat16

    def mm(x, w_ref, b_ref):
        # bf16 MXU dot with f32 accumulation; bias add / activations stay f32 (VPU).
        return jnp.dot(x.astype(bf16), w_ref[...],
                       preferred_element_type=jnp.float32) + b_ref[...]

    packed = packed_r[...]                                    # (TM, E+10+3K) f32
    embed = packed[:, :E]
    anchor_xyz = packed[:, E:E + 3]
    opacity_decay = packed[:, E + 9 + 3 * K:E + 10 + 3 * K]   # (TM, 1)

    # ---- Deformable: backbone + fused delta heads ----
    # Frame-embed contribution (constant over anchors) is pre-folded into bd1.
    # TODO(synk): TempoMixture internals (skip connections, decoupled delta
    # embed) are not in the reference source; approximated as a 2-layer ReLU
    # backbone with one fused linear head [features | d_xyz | d_off | d_oe | d_se].
    h = relu(mm(embed, wd1_r, bd1_r))
    h = relu(mm(h, wd2_r, bd2_r))
    dheads = mm(h, wdh_r, bdh_r)                              # (TM, F+9+3K)
    features = dheads[:, :F]

    # Delta columns mirror the packed anchor strip [xyz | off | oe | se]:
    # ONE contiguous (9+3K)-lane add instead of four sliced adds.
    deformed = packed[:, E:E + 9 + 3 * K] + dheads[:, F:F + 9 + 3 * K]
    xyz = deformed[:, 0:3]
    offsets = deformed[:, 3:3 + 3 * K]
    offset_extend = deformed[:, 3 + 3 * K:6 + 3 * K]
    scale_extend = deformed[:, 6 + 3 * K:9 + 3 * K]

    # ---- Scaffold ----
    # TODO(synk): Anchors.childs_xyz is not in the reference source; using the
    # standard scaffold convention child = xyz + offset * exp(offset_extend).
    ext = jnp.exp(offset_extend)
    means = _tile_k(xyz, K) + offsets * _tile_k(ext, K)       # (TM, 3K)

    ob = cam_r[...] - anchor_xyz                              # (TM, 3)
    ob = ob * jax.lax.rsqrt(jnp.sum(ob * ob, axis=-1, keepdims=True))
    # spawn_xyz_bypass = True; fea_ob = [features | embed | ob_view | anchor_xyz]
    fea_ob = jnp.concatenate([features, embed, ob, anchor_xyz], axis=-1)

    # Four scaffold heads fused: first layers side-by-side (s_in, 4H), second
    # layers block-diagonal in [scales | opacities | colors | quats] order so
    # the sigmoid-activated outputs form one contiguous lane strip.  Pad lanes
    # of the output slab are emitted by zero weight columns (free on the MXU).
    # TODO(synk): MLP_builder's `view_dependent` branch is not in the reference
    # source; all heads are modeled as 2-layer MLPs with the stated activation.
    h2 = relu(mm(fea_ob, ws1_r, bs1_r))                       # (TM, 4H)
    heads = mm(h2, ws2_r, bs2_r)                              # (TM, 3K+K+3K+4K+pad)
    sig = jax.nn.sigmoid(heads[:, :7 * K])                    # one EUP pass
    scales = sig[:, :3 * K] * _tile_k(scale_extend, K)
    opac = 1.0 - jnp.exp(-(sig[:, 3 * K:4 * K] / (opacity_decay + 1e-6)))  # decay()
    sh0 = (sig[:, 4 * K:7 * K] - 0.5) * (1.0 / SH_C0)          # rgb_to_sh

    # Store contiguous groups straight into the lane-dense 128-wide output
    # block (no 10-way concatenate, no materialized slab temp).
    c = 0
    out_r[:, c:c + F] = features;             c += F
    out_r[:, c:c + E] = embed;                c += E
    out_r[:, c:c + 9 + 3 * K] = deformed;     c += 9 + 3 * K   # xyz|off|oe|se
    out_r[:, c:c + 3 * K] = means;            c += 3 * K
    out_r[:, c:c + 3 * K] = scales;           c += 3 * K
    out_r[:, c:c + K] = opac;                 c += K
    out_r[:, c:c + 3 * K] = sh0;              c += 3 * K
    out_r[:, c:] = heads[:, 7 * K:]                            # quats + zero pad


# ----------------------------------------------------------------------------
# Wrapper: one-time packing/fusion + jitted per-frame forward
# ----------------------------------------------------------------------------
class _Meta(NamedTuple):
    N: int; E: int; K: int; F: int
    Hd: int; Hs: int; s_in: int
    tm: int; n_pad: int; pw: int
    d_total: int; d_out: int; pad: int


def _pick_tile(N, tm_req):
    tm = max(8, _round_up(min(tm_req, _round_up(N, 8)), 8))
    # Keep at least 2 grid steps when possible so v7x's second TensorCore
    # (sharded via dimension_semantics=("parallel",)) gets work.
    if _round_up(N, tm) // tm < 2 and N > 8:
        tm = max(8, _round_up(-(-N // 2), 8))
    return tm, _round_up(N, tm)


@functools.partial(jax.jit, static_argnames=("meta",))
def _decaf_forward(arrays, cam_t, frame, *, meta: _Meta):
    N, E, K, F = meta.N, meta.E, meta.K, meta.F
    cam_t = jnp.asarray(cam_t, jnp.float32).reshape(1, 3)     # cam.c2w_t
    frame = jnp.asarray(frame, jnp.int32)

    # get_frame_embed (embed_accumulative=False, frame_embed_entangle_range=0),
    # folded into the first-layer bias (constant over anchors).
    fe = jax.lax.dynamic_slice_in_dim(arrays["frame_embed_table"], frame, 1, axis=0)
    bd1_eff = arrays["bd1"] + fe @ arrays["wd1_f"]            # (1, Hd) f32

    weights = [arrays["wd1_a"], bd1_eff, arrays["wd2"], arrays["bd2"],
               arrays["wdh"], arrays["bdh"], arrays["ws1"], arrays["bs1"],
               arrays["ws2"], arrays["bs2"]]

    # Advisory cost estimate so XLA schedules neighboring ops around the kernel.
    mac = (E * meta.Hd + meta.Hd * meta.Hd + meta.Hd * (F + 9 + 3 * K)
           + meta.s_in * 4 * meta.Hs + 4 * meta.Hs * (11 * K + meta.pad))
    weight_bytes = sum(int(w.size) * jnp.dtype(w.dtype).itemsize
                       for w in (arrays["wd1_a"], arrays["wd2"], arrays["wdh"],
                                 arrays["ws1"], arrays["ws2"]))
    cost = pl.CostEstimate(
        flops=2 * mac * meta.n_pad,
        transcendentals=(4 + 8 * K) * meta.n_pad,
        bytes_accessed=meta.n_pad * (meta.pw + meta.d_out) * 4 + weight_bytes)

    # Only raise the scoped VMEM limit when the tile needs it (keeps v7x safe).
    est_vmem = meta.tm * 4 * (2 * meta.pw + 2 * meta.d_out + 768) + (2 << 20)
    vmem_limit = int(min(48 << 20, est_vmem + (8 << 20))) if est_vmem > (12 << 20) else None

    out = pl.pallas_call(
        functools.partial(decaf_kernel, E=E, K=K, F=F),
        out_shape=jax.ShapeDtypeStruct((meta.n_pad, meta.d_out), jnp.float32),
        grid=(meta.n_pad // meta.tm,),
        in_specs=[pl.BlockSpec((meta.tm, meta.pw), lambda i: (i, 0)),
                  pl.BlockSpec((1, 3), lambda i: (0, 0))]
                 + [pl.BlockSpec(w.shape, lambda i: (0, 0)) for w in weights],
        out_specs=pl.BlockSpec((meta.tm, meta.d_out), lambda i: (i, 0)),
        compiler_params=pltpu.CompilerParams(
            dimension_semantics=("parallel",),
            vmem_limit_bytes=vmem_limit),
        cost_estimate=cost,
    )(arrays["packed"], cam_t, *weights)

    out = out[:N]
    out_dims = [F + E, 3, 3 * K, 3, 3, 3 * K, 3 * K, K, 3 * K, 4 * K]
    pieces, c = [], 0
    for d in out_dims:
        pieces.append(out[:, c:c + d]); c += d
    (feature, xyz, offsets, offset_extend, scale_extend,
     means, scales, opac, sh0, quats) = pieces

    aks = {
        "feature": feature,                                   # (N, F+E)
        "xyz": xyz,                                           # (N, 3)
        "offsets": offsets.reshape(N, K, 3),                  # (N, K, 3)
        "offset_extend": offset_extend,                       # (N, 3)
        "scale_extend": scale_extend,                         # (N, 3)
        "opacity_decay": arrays["anchor_opacity_decay"][:, 0],  # (N,)
    }
    gs = {
        "means": means.reshape(N * K, 3),
        "scales": scales.reshape(N * K, 3),
        "quats": quats.reshape(N * K, 4),
        "opacities": opac.reshape(N * K),
        "sh0": sh0.reshape(N * K, 3)[:, None, :],             # (N*K, 1, 3)
        "shN": jnp.zeros((N * K, 0, 3), jnp.float32),         # sh_degree = 0
    }
    return gs, aks


def make_decaf_forward(params, tm=1024):
    """One-time (frame-independent) packing & weight fusion; returns forward(cam_t, frame)."""
    p = params
    N, E = p["anchor_embed"].shape
    K = p["anchor_offsets"].shape[1] // 3
    F = p["wf"].shape[1]
    Hd = p["wd1"].shape[1]
    Hs = p["ws1"].shape[1]
    s_in = p["ws1"].shape[0]
    bf16 = jnp.bfloat16

    tm, n_pad = _pick_tile(N, tm)
    pw = E + 10 + 3 * K

    # Pack the six per-anchor tensors into one lane-contiguous block (one DMA/tile).
    packed = jnp.concatenate(
        [p["anchor_embed"], p["anchor_xyz"], p["anchor_offsets"],
         p["anchor_offset_extend"], p["anchor_scale_extend"],
         p["anchor_opacity_decay"]], axis=-1).astype(jnp.float32)
    if n_pad != N:
        pad_rows = jnp.zeros((n_pad - N, pw), jnp.float32)
        pad_rows = pad_rows.at[:, pw - 1].set(1.0)            # keep padded rows finite
        packed = jnp.concatenate([packed, pad_rows], axis=0)

    out_dims = [F + E, 3, 3 * K, 3, 3, 3 * K, 3 * K, K, 3 * K, 4 * K]
    d_total = sum(out_dims)
    d_out = _round_up(d_total, 128)
    pad = d_out - d_total

    # Fuse the five deform output heads into one matmul; delta columns mirror
    # the packed anchor strip order [xyz | off | oe | se].
    wdh = jnp.concatenate([p["wf"], p["wdx"], p["wdo"], p["wdoe"], p["wdse"]], axis=1)
    bdh = jnp.concatenate([p["bf"], p["bdx"], p["bdo"], p["bdoe"], p["bdse"]], axis=1)

    # Fuse the four scaffold heads in [scales | opacities | colors | quats] order.
    ws1 = jnp.concatenate([p["ws1"], p["wo1"], p["wc1"], p["wq1"]], axis=1)
    bs1 = jnp.concatenate([p["bs1"], p["bo1"], p["bc1"], p["bq1"]], axis=1)
    ws2 = _block_diag([p["ws2"], p["wo2"], p["wc2"], p["wq2"]])
    bs2 = jnp.concatenate([p["bs2"], p["bo2"], p["bc2"], p["bq2"]], axis=1)
    if pad:
        # Output-slab pad lanes come out of the head matmul for free.
        ws2 = jnp.concatenate([ws2, jnp.zeros((ws2.shape[0], pad), ws2.dtype)], axis=1)
        bs2 = jnp.concatenate([bs2, jnp.zeros((1, pad), bs2.dtype)], axis=1)

    arrays = {
        "packed": packed,
        "wd1_a": p["wd1"][:E].astype(bf16),                   # anchor-embed part
        "wd1_f": p["wd1"][E:],                                # frame-embed part (f32)
        "bd1": p["bd1"],
        "wd2": p["wd2"].astype(bf16), "bd2": p["bd2"],
        "wdh": wdh.astype(bf16), "bdh": bdh,
        "ws1": ws1.astype(bf16), "bs1": bs1,
        "ws2": ws2.astype(bf16), "bs2": bs2,
        "frame_embed_table": p["frame_embed_table"],
        "anchor_opacity_decay": p["anchor_opacity_decay"],
    }
    meta = _Meta(N=N, E=E, K=K, F=F, Hd=Hd, Hs=Hs, s_in=s_in,
                 tm=tm, n_pad=n_pad, pw=pw,
                 d_total=d_total, d_out=d_out, pad=pad)

    def forward(cam_t, frame):
        return _decaf_forward(arrays, cam_t, frame, meta=meta)

    return forward


# ----------------------------------------------------------------------------
# Pure-JAX reference (for verification; f32 end-to-end)
# ----------------------------------------------------------------------------
def decaf_reference(params, cam_t, frame):
    p = params
    N, E = p["anchor_embed"].shape
    K = p["anchor_offsets"].shape[1] // 3
    relu, sig = jax.nn.relu, jax.nn.sigmoid

    fe = jnp.broadcast_to(p["frame_embed_table"][frame][None],
                          (N, p["frame_embed_table"].shape[1]))
    x_in = jnp.concatenate([p["anchor_embed"], fe], -1)
    h = relu(x_in @ p["wd1"] + p["bd1"])
    h = relu(h @ p["wd2"] + p["bd2"])
    features = h @ p["wf"] + p["bf"]
    d_xyz = h @ p["wdx"] + p["bdx"]
    d_off = h @ p["wdo"] + p["bdo"]
    d_oe = h @ p["wdoe"] + p["bdoe"]
    d_se = h @ p["wdse"] + p["bdse"]

    xyz = p["anchor_xyz"] + d_xyz
    offsets = p["anchor_offsets"] + d_off
    offset_extend = p["anchor_offset_extend"] + d_oe
    scale_extend = p["anchor_scale_extend"] + d_se
    feature = jnp.concatenate([features, p["anchor_embed"]], -1)

    ext = jnp.exp(offset_extend)
    means = (xyz[:, None, :] + offsets.reshape(N, K, 3) * ext[:, None, :]).reshape(N * K, 3)

    ob = cam_t.reshape(1, 3) - p["anchor_xyz"]
    ob = ob / jnp.sqrt(jnp.sum(ob * ob, -1, keepdims=True))
    fea_ob = jnp.concatenate([feature, ob, p["anchor_xyz"]], -1)

    def head(a, b, c, d):
        return relu(fea_ob @ p[a] + p[b]) @ p[c] + p[d]

    scales = sig(head("ws1", "bs1", "ws2", "bs2")).reshape(N, K, 3) * scale_extend[:, None, :]
    quats = head("wq1", "bq1", "wq2", "bq2").reshape(N * K, 4)
    op = sig(head("wo1", "bo1", "wo2", "bo2")).reshape(N * K)
    od = jnp.broadcast_to(p["anchor_opacity_decay"], (N, K)).reshape(N * K)
    op = 1.0 - jnp.exp(-(op / (od + 1e-6)))
    colors = sig(head("wc1", "bc1", "wc2", "bc2")).reshape(N * K, 3)

    aks = {"feature": feature, "xyz": xyz, "offsets": offsets.reshape(N, K, 3),
           "offset_extend": offset_extend, "scale_extend": scale_extend,
           "opacity_decay": p["anchor_opacity_decay"][:, 0]}
    gs = {"means": means, "scales": scales.reshape(N * K, 3), "quats": quats,
          "opacities": op, "sh0": ((colors - 0.5) / SH_C0)[:, None, :],
          "shN": jnp.zeros((N * K, 0, 3), jnp.float32)}
    return gs, aks


# ----------------------------------------------------------------------------
# Deterministic parameter init (synthetic; shapes follow the module __init__)
# ----------------------------------------------------------------------------
def init_params(key, *, N=64, K=4, embed_dim=16, frame_embed_dim=8,
                deform_hidden=32, feature_dim=16, spawn_hidden=32, frame_length=6):
    keys = iter(jax.random.split(key, 64))

    def nrm(shape, scale=1.0):
        return jax.random.normal(next(keys), shape, jnp.float32) * scale

    def lin(din, dout):
        w = nrm((din, dout), 1.0 / (din ** 0.5))
        b = nrm((1, dout), 0.01)
        return w, b

    p = {}
    p["anchor_embed"] = nrm((N, embed_dim), 0.1)
    p["anchor_xyz"] = nrm((N, 3), 1.0)
    p["anchor_offsets"] = nrm((N, 3 * K), 0.1)
    p["anchor_offset_extend"] = nrm((N, 3), 0.1)
    p["anchor_scale_extend"] = nrm((N, 3), 0.1)
    p["anchor_opacity_decay"] = jax.random.uniform(next(keys), (N, 1), jnp.float32, 0.1, 0.6)
    p["frame_embed_table"] = nrm((frame_length, frame_embed_dim), 0.1)

    d_in = embed_dim + frame_embed_dim
    p["wd1"], p["bd1"] = lin(d_in, deform_hidden)
    p["wd2"], p["bd2"] = lin(deform_hidden, deform_hidden)
    p["wf"], p["bf"] = lin(deform_hidden, feature_dim)
    p["wdx"], p["bdx"] = lin(deform_hidden, 3)
    p["wdo"], p["bdo"] = lin(deform_hidden, 3 * K)
    p["wdoe"], p["bdoe"] = lin(deform_hidden, 3)
    p["wdse"], p["bdse"] = lin(deform_hidden, 3)

    s_in = feature_dim + embed_dim + 3 + 3  # feature + anchor_embed + ob_view + xyz bypass
    p["ws1"], p["bs1"] = lin(s_in, spawn_hidden)
    p["ws2"], p["bs2"] = lin(spawn_hidden, 3 * K)
    p["wq1"], p["bq1"] = lin(s_in, spawn_hidden)
    p["wq2"], p["bq2"] = lin(spawn_hidden, 4 * K)
    p["wo1"], p["bo1"] = lin(s_in, spawn_hidden)
    p["wo2"], p["bo2"] = lin(spawn_hidden, K)
    p["wc1"], p["bc1"] = lin(s_in, spawn_hidden)
    p["wc2"], p["bc2"] = lin(spawn_hidden, 3 * K)
    return p


if __name__ == "__main__":
    key = jax.random.PRNGKey(0)
    k_params, k_cam = jax.random.split(key)
    N, K = 64, 4
    params = init_params(k_params, N=N, K=K)
    cam_t = jax.random.normal(k_cam, (1, 3), jnp.float32) * 2.0   # cam.c2w_t
    frame_base = 0
    cam_frame = 2
    frame = cam_frame - frame_base

    forward = make_decaf_forward(params, tm=1024)
    gs, aks = forward(cam_t, frame)
    jax.tree_util.tree_map(jax.block_until_ready, (gs, aks))

    gs_ref, aks_ref = decaf_reference(params, cam_t, frame)

    def check(a, b):
        assert a.shape == b.shape, (a.shape, b.shape)
        assert a.dtype == b.dtype, (a.dtype, b.dtype)
        if a.size:
            assert bool(jnp.allclose(a, b, atol=1e-1, rtol=1e-1)), float(
                jnp.max(jnp.abs(a - b)))

    for name in gs_ref:
        check(gs[name], gs_ref[name])
    for name in aks_ref:
        check(aks[name], aks_ref[name])

    print("KERNEL_OK")
</pallas_src>

<mosaic_0001>
module attributes {stable_mosaic.version = 11 : i64} {
  func.func @decaf_kernel(%arg0: i32, %arg1: memref<32x38xf32, #tpu.memory_space<vmem>>, %arg2: memref<1x3xf32, #tpu.memory_space<vmem>>, %arg3: memref<16x32xbf16, #tpu.memory_space<vmem>>, %arg4: memref<1x32xf32, #tpu.memory_space<vmem>>, %arg5: memref<32x32xbf16, #tpu.memory_space<vmem>>, %arg6: memref<1x32xf32, #tpu.memory_space<vmem>>, %arg7: memref<32x37xbf16, #tpu.memory_space<vmem>>, %arg8: memref<1x37xf32, #tpu.memory_space<vmem>>, %arg9: memref<38x128xbf16, #tpu.memory_space<vmem>>, %arg10: memref<1x128xf32, #tpu.memory_space<vmem>>, %arg11: memref<128x63xbf16, #tpu.memory_space<vmem>>, %arg12: memref<1x63xf32, #tpu.memory_space<vmem>>, %arg13: memref<32x128xf32, #tpu.memory_space<vmem>>) attributes {dimension_semantics = [#tpu.dimension_semantics<parallel>], iteration_bounds = array<i64: 2>, scalar_prefetch = 0 : i64, scratch_operands = 0 : i64, tpu.core_type = #tpu.core_type<tc>, window_params = [{transform_indices = @transform_0, window_bounds = array<i64: 32, 38>}, {pipeline_mode = #tpu.pipeline_mode<synchronous>, transform_indices = @transform_1, window_bounds = array<i64: 1, 3>}, {pipeline_mode = #tpu.pipeline_mode<synchronous>, transform_indices = @transform_2, window_bounds = array<i64: 16, 32>}, {pipeline_mode = #tpu.pipeline_mode<synchronous>, transform_indices = @transform_3, window_bounds = array<i64: 1, 32>}, {pipeline_mode = #tpu.pipeline_mode<synchronous>, transform_indices = @transform_4, window_bounds = array<i64: 32, 32>}, {pipeline_mode = #tpu.pipeline_mode<synchronous>, transform_indices = @transform_5, window_bounds = array<i64: 1, 32>}, {pipeline_mode = #tpu.pipeline_mode<synchronous>, transform_indices = @transform_6, window_bounds = array<i64: 32, 37>}, {pipeline_mode = #tpu.pipeline_mode<synchronous>, transform_indices = @transform_7, window_bounds = array<i64: 1, 37>}, {pipeline_mode = #tpu.pipeline_mode<synchronous>, transform_indices = @transform_8, window_bounds = array<i64: 38, 128>}, {pipeline_mode = #tpu.pipeline_mode<synchronous>, transform_indices = @transform_9, window_bounds = array<i64: 1, 128>}, {pipeline_mode = #tpu.pipeline_mode<synchronous>, transform_indices = @transform_10, window_bounds = array<i64: 128, 63>}, {pipeline_mode = #tpu.pipeline_mode<synchronous>, transform_indices = @transform_11, window_bounds = array<i64: 1, 63>}, {transform_indices = @transform_12, window_bounds = array<i64: 32, 128>}]} {
    %c0 = arith.constant 0 : index
    %c0_0 = arith.constant 0 : index
    %0 = vector.load %arg1[%c0, %c0_0] : memref<32x38xf32, #tpu.memory_space<vmem>>, vector<32x38xf32>
    %1 = vector.extract_strided_slice %0 {offsets = [0, 0], sizes = [32, 16], strides = [1, 1]} : vector<32x38xf32> to vector<32x16xf32>
    %2 = vector.extract_strided_slice %0 {offsets = [0, 16], sizes = [32, 3], strides = [1, 1]} : vector<32x38xf32> to vector<32x3xf32>
    %3 = vector.extract_strided_slice %0 {offsets = [0, 37], sizes = [32, 1], strides = [1, 1]} : vector<32x38xf32> to vector<32x1xf32>
    %4 = arith.truncf %1 : vector<32x16xf32> to vector<32x16xbf16>
    %c0_1 = arith.constant 0 : index
    %c0_2 = arith.constant 0 : index
    %5 = vector.load %arg3[%c0_1, %c0_2] : memref<16x32xbf16, #tpu.memory_space<vmem>>, vector<16x32xbf16>
    %cst = arith.constant dense<0.000000e+00> : vector<32x32xf32>
    %6 = tpu.matmul %4, %5, %cst {dimension_numbers = #tpu.dot_dimension_numbers<[1], [0], [0], [1], [0, 0, 1, 1], [], []>} : vector<32x16xbf16>, vector<16x32xbf16>, vector<32x32xf32> -> vector<32x32xf32>
    %c0_3 = arith.constant 0 : index
    %c0_4 = arith.constant 0 : index
    %7 = vector.load %arg4[%c0_3, %c0_4] : memref<1x32xf32, #tpu.memory_space<vmem>>, vector<1x32xf32>
    %8 = vector.broadcast %7 : vector<1x32xf32> to vector<32x32xf32>
    %9 = arith.addf %6, %8 : vector<32x32xf32>
    %cst_5 = arith.constant 0.000000e+00 : f32
    %10 = vector.broadcast %cst_5 : f32 to vector<32x32xf32>
    %11 = arith.maximumf %9, %10 : vector<32x32xf32>
    %12 = arith.truncf %11 : vector<32x32xf32> to vector<32x32xbf16>
    %c0_6 = arith.constant 0 : index
    %c0_7 = arith.constant 0 : index
    %13 = vector.load %arg5[%c0_6, %c0_7] : memref<32x32xbf16, #tpu.memory_space<vmem>>, vector<32x32xbf16>
    %cst_8 = arith.constant dense<0.000000e+00> : vector<32x32xf32>
    %14 = tpu.matmul %12, %13, %cst_8 {dimension_numbers = #tpu.dot_dimension_numbers<[1], [0], [0], [1], [0, 0, 1, 1], [], []>} : vector<32x32xbf16>, vector<32x32xbf16>, vector<32x32xf32> -> vector<32x32xf32>
    %c0_9 = arith.constant 0 : index
    %c0_10 = arith.constant 0 : index
    %15 = vector.load %arg6[%c0_9, %c0_10] : memref<1x32xf32, #tpu.memory_space<vmem>>, vector<1x32xf32>
    %16 = vector.broadcast %15 : vector<1x32xf32> to vector<32x32xf32>
    %17 = arith.addf %14, %16 : vector<32x32xf32>
    %cst_11 = arith.constant 0.000000e+00 : f32
    %18 = vector.broadcast %cst_11 : f32 to vector<32x32xf32>
    %19 = arith.maximumf %17, %18 : vector<32x32xf32>
    %20 = arith.truncf %19 : vector<32x32xf32> to vector<32x32xbf16>
    %c0_12 = arith.constant 0 : index
    %c0_13 = arith.constant 0 : index
    %21 = vector.load %arg7[%c0_12, %c0_13] : memref<32x37xbf16, #tpu.memory_space<vmem>>, vector<32x37xbf16>
    %cst_14 = arith.constant dense<0.000000e+00> : vector<32x37xf32>
    %22 = tpu.matmul %20, %21, %cst_14 {dimension_numbers = #tpu.dot_dimension_numbers<[1], [0], [0], [1], [0, 0, 1, 1], [], []>} : vector<32x32xbf16>, vector<32x37xbf16>, vector<32x37xf32> -> vector<32x37xf32>
    %c0_15 = arith.constant 0 : index
    %c0_16 = arith.constant 0 : index
    %23 = vector.load %arg8[%c0_15, %c0_16] : memref<1x37xf32, #tpu.memory_space<vmem>>, vector<1x37xf32>
    %24 = vector.broadcast %23 : vector<1x37xf32> to vector<32x37xf32>
    %25 = arith.addf %22, %24 : vector<32x37xf32>
    %26 = vector.extract_strided_slice %25 {offsets = [0, 0], sizes = [32, 16], strides = [1, 1]} : vector<32x37xf32> to vector<32x16xf32>
    %27 = vector.extract_strided_slice %0 {offsets = [0, 16], sizes = [32, 21], strides = [1, 1]} : vector<32x38xf32> to vector<32x21xf32>
    %28 = vector.extract_strided_slice %25 {offsets = [0, 16], sizes = [32, 21], strides = [1, 1]} : vector<32x37xf32> to vector<32x21xf32>
    %29 = arith.addf %27, %28 : vector<32x21xf32>
    %30 = vector.extract_strided_slice %29 {offsets = [0, 0], sizes = [32, 3], strides = [1, 1]} : vector<32x21xf32> to vector<32x3xf32>
    %31 = vector.extract_strided_slice %29 {offsets = [0, 3], sizes = [32, 12], strides = [1, 1]} : vector<32x21xf32> to vector<32x12xf32>
    %32 = vector.extract_strided_slice %29 {offsets = [0, 15], sizes = [32, 3], strides = [1, 1]} : vector<32x21xf32> to vector<32x3xf32>
    %33 = vector.extract_strided_slice %29 {offsets = [0, 18], sizes = [32, 3], strides = [1, 1]} : vector<32x21xf32> to vector<32x3xf32>
    %34 = math.exp %32 : vector<32x3xf32>
    %35 = tpu.concatenate %30, %30, %30, %30 in 1 : vector<32x3xf32>, vector<32x3xf32>, vector<32x3xf32>, vector<32x3xf32> -> vector<32x12xf32>
    %36 = tpu.concatenate %34, %34, %34, %34 in 1 : vector<32x3xf32>, vector<32x3xf32>, vector<32x3xf32>, vector<32x3xf32> -> vector<32x12xf32>
    %37 = arith.mulf %31, %36 : vector<32x12xf32>
    %38 = arith.addf %35, %37 : vector<32x12xf32>
    %c0_17 = arith.constant 0 : index
    %c0_18 = arith.constant 0 : index
    %39 = vector.load %arg2[%c0_17, %c0_18] : memref<1x3xf32, #tpu.memory_space<vmem>>, vector<1x3xf32>
    %40 = vector.broadcast %39 : vector<1x3xf32> to vector<32x3xf32>
    %41 = arith.subf %40, %2 : vector<32x3xf32>
    %42 = arith.mulf %41, %41 : vector<32x3xf32>
    %cst_19 = arith.constant dense<0.000000e+00> : vector<32xf32>
    %43 = vector.multi_reduction <add>, %42, %cst_19 [1] : vector<32x3xf32> to vector<32xf32>
    %44 = vector.shape_cast %43 : vector<32xf32> to vector<32x1xf32>
    %45 = math.rsqrt %44 : vector<32x1xf32>
    %46 = vector.broadcast %45 : vector<32x1xf32> to vector<32x3xf32>
    %47 = arith.mulf %41, %46 : vector<32x3xf32>
    %48 = tpu.concatenate %26, %1, %47, %2 in 1 : vector<32x16xf32>, vector<32x16xf32>, vector<32x3xf32>, vector<32x3xf32> -> vector<32x38xf32>
    %49 = arith.truncf %48 : vector<32x38xf32> to vector<32x38xbf16>
    %c0_20 = arith.constant 0 : index
    %c0_21 = arith.constant 0 : index
    %50 = vector.load %arg9[%c0_20, %c0_21] : memref<38x128xbf16, #tpu.memory_space<vmem>>, vector<38x128xbf16>
    %cst_22 = arith.constant dense<0.000000e+00> : vector<32x128xf32>
    %51 = tpu.matmul %49, %50, %cst_22 {dimension_numbers = #tpu.dot_dimension_numbers<[1], [0], [0], [1], [0, 0, 1, 1], [], []>} : vector<32x38xbf16>, vector<38x128xbf16>, vector<32x128xf32> -> vector<32x128xf32>
    %c0_23 = arith.constant 0 : index
    %c0_24 = arith.constant 0 : index
    %52 = vector.load %arg10[%c0_23, %c0_24] : memref<1x128xf32, #tpu.memory_space<vmem>>, vector<1x128xf32>
    %53 = vector.broadcast %52 : vector<1x128xf32> to vector<32x128xf32>
    %54 = arith.addf %51, %53 : vector<32x128xf32>
    %cst_25 = arith.constant 0.000000e+00 : f32
    %55 = vector.broadcast %cst_25 : f32 to vector<32x128xf32>
    %56 = arith.maximumf %54, %55 : vector<32x128xf32>
    %57 = arith.truncf %56 : vector<32x128xf32> to vector<32x128xbf16>
    %c0_26 = arith.constant 0 : index
    %c0_27 = arith.constant 0 : index
    %58 = vector.load %arg11[%c0_26, %c0_27] : memref<128x63xbf16, #tpu.memory_space<vmem>>, vector<128x63xbf16>
    %cst_28 = arith.constant dense<0.000000e+00> : vector<32x63xf32>
    %59 = tpu.matmul %57, %58, %cst_28 {dimension_numbers = #tpu.dot_dimension_numbers<[1], [0], [0], [1], [0, 0, 1, 1], [], []>} : vector<32x128xbf16>, vector<128x63xbf16>, vector<32x63xf32> -> vector<32x63xf32>
    %c0_29 = arith.constant 0 : index
    %c0_30 = arith.constant 0 : index
    %60 = vector.load %arg12[%c0_29, %c0_30] : memref<1x63xf32, #tpu.memory_space<vmem>>, vector<1x63xf32>
    %61 = vector.broadcast %60 : vector<1x63xf32> to vector<32x63xf32>
    %62 = arith.addf %59, %61 : vector<32x63xf32>
    %63 = vector.extract_strided_slice %62 {offsets = [0, 0], sizes = [32, 28], strides = [1, 1]} : vector<32x63xf32> to vector<32x28xf32>
    %64 = arith.negf %63 : vector<32x28xf32>
    %65 = math.exp %64 : vector<32x28xf32>
    %cst_31 = arith.constant 1.000000e+00 : f32
    %66 = vector.broadcast %cst_31 : f32 to vector<32x28xf32>
    %67 = arith.addf %66, %65 : vector<32x28xf32>
    %68 = arith.divf %66, %67 : vector<32x28xf32>
    %69 = vector.extract_strided_slice %68 {offsets = [0, 0], sizes = [32, 12], strides = [1, 1]} : vector<32x28xf32> to vector<32x12xf32>
    %70 = tpu.concatenate %33, %33, %33, %33 in 1 : vector<32x3xf32>, vector<32x3xf32>, vector<32x3xf32>, vector<32x3xf32> -> vector<32x12xf32>
    %71 = arith.mulf %69, %70 : vector<32x12xf32>
    %72 = vector.extract_strided_slice %68 {offsets = [0, 12], sizes = [32, 4], strides = [1, 1]} : vector<32x28xf32> to vector<32x4xf32>
    %cst_32 = arith.constant 9.99999997E-7 : f32
    %73 = vector.broadcast %cst_32 : f32 to vector<32x1xf32>
    %74 = arith.addf %3, %73 : vector<32x1xf32>
    %75 = vector.broadcast %74 : vector<32x1xf32> to vector<32x4xf32>
    %76 = arith.divf %72, %75 : vector<32x4xf32>
    %cst_33 = arith.constant 0.000000e+00 : f32
    %77 = vector.broadcast %cst_33 : f32 to vector<32x4xf32>
    %78 = arith.subf %77, %76 : vector<32x4xf32>
    %79 = math.exp %78 : vector<32x4xf32>
    %cst_34 = arith.constant 1.000000e+00 : f32
    %80 = vector.broadcast %cst_34 : f32 to vector<32x4xf32>
    %81 = arith.subf %80, %79 : vector<32x4xf32>
    %82 = vector.extract_strided_slice %68 {offsets = [0, 16], sizes = [32, 12], strides = [1, 1]} : vector<32x28xf32> to vector<32x12xf32>
    %cst_35 = arith.constant 5.000000e-01 : f32
    %83 = vector.broadcast %cst_35 : f32 to vector<32x12xf32>
    %84 = arith.subf %82, %83 : vector<32x12xf32>
    %cst_36 = arith.constant 3.54490781 : f32
    %85 = vector.broadcast %cst_36 : f32 to vector<32x12xf32>
    %86 = arith.mulf %84, %85 : vector<32x12xf32>
    %c0_37 = arith.constant 0 : index
    %c0_38 = arith.constant 0 : index
    %87 = vector.load %arg13[%c0_37, %c0_38] : memref<32x128xf32, #tpu.memory_space<vmem>>, vector<32x16xf32>
    tpu.vector_store %arg13[%c0_37, %c0_38], %26 {strides = array<i32>} : memref<32x128xf32, #tpu.memory_space<vmem>>, vector<32x16xf32>,
    %c0_39 = arith.constant 0 : index
    %c16 = arith.constant 16 : index
    %88 = vector.load %arg13[%c0_39, %c16] : memref<32x128xf32, #tpu.memory_space<vmem>>, vector<32x16xf32>
    tpu.vector_store %arg13[%c0_39, %c16], %1 {strides = array<i32>} : memref<32x128xf32, #tpu.memory_space<vmem>>, vector<32x16xf32>,
    %c0_40 = arith.constant 0 : index
    %c32 = arith.constant 32 : index
    %89 = vector.load %arg13[%c0_40, %c32] : memref<32x128xf32, #tpu.memory_space<vmem>>, vector<32x21xf32>
    tpu.vector_store %arg13[%c0_40, %c32], %29 {strides = array<i32>} : memref<32x128xf32, #tpu.memory_space<vmem>>, vector<32x21xf32>,
    %c0_41 = arith.constant 0 : index
    %c53 = arith.constant 53 : index
    %90 = vector.load %arg13[%c0_41, %c53] : memref<32x128xf32, #tpu.memory_space<vmem>>, vector<32x12xf32>
    tpu.vector_store %arg13[%c0_41, %c53], %38 {strides = array<i32>} : memref<32x128xf32, #tpu.memory_space<vmem>>, vector<32x12xf32>,
    %c0_42 = arith.constant 0 : index
    %c65 = arith.constant 65 : index
    %91 = vector.load %arg13[%c0_42, %c65] : memref<32x128xf32, #tpu.memory_space<vmem>>, vector<32x12xf32>
    tpu.vector_store %arg13[%c0_42, %c65], %71 {strides = array<i32>} : memref<32x128xf32, #tpu.memory_space<vmem>>, vector<32x12xf32>,
    %c0_43 = arith.constant 0 : index
    %c77 = arith.constant 77 : index
    %92 = vector.load %arg13[%c0_43, %c77] : memref<32x128xf32, #tpu.memory_space<vmem>>, vector<32x4xf32>
    tpu.vector_store %arg13[%c0_43, %c77], %81 {strides = array<i32>} : memref<32x128xf32, #tpu.memory_space<vmem>>, vector<32x4xf32>,
    %c0_44 = arith.constant 0 : index
    %c81 = arith.constant 81 : index
    %93 = vector.load %arg13[%c0_44, %c81] : memref<32x128xf32, #tpu.memory_space<vmem>>, vector<32x12xf32>
    tpu.vector_store %arg13[%c0_44, %c81], %86 {strides = array<i32>} : memref<32x128xf32, #tpu.memory_space<vmem>>, vector<32x12xf32>,
    %94 = vector.extract_strided_slice %62 {offsets = [0, 28], sizes = [32, 35], strides = [1, 1]} : vector<32x63xf32> to vector<32x35xf32>
    %c0_45 = arith.constant 0 : index
    %c93 = arith.constant 93 : index
    %95 = vector.load %arg13[%c0_45, %c93] : memref<32x128xf32, #tpu.memory_space<vmem>>, vector<32x35xf32>
    tpu.vector_store %arg13[%c0_45, %c93], %94 {strides = array<i32>} : memref<32x128xf32, #tpu.memory_space<vmem>>, vector<32x35xf32>,
    return
  }
  func.func @transform_0(%arg0: i32) -> (i32, i32) {
    %c0_i32 = arith.constant 0 : i32
    %c0_i32_0 = arith.constant 0 : i32
    return %arg0, %c0_i32 : i32, i32
  }
  func.func @transform_1(%arg0: i32) -> (i32, i32) {
    %c0_i32 = arith.constant 0 : i32
    %c0_i32_0 = arith.constant 0 : i32
    %c0_i32_1 = arith.constant 0 : i32
    return %c0_i32, %c0_i32_0 : i32, i32
  }
  func.func @transform_2(%arg0: i32) -> (i32, i32) {
    %c0_i32 = arith.constant 0 : i32
    %c0_i32_0 = arith.constant 0 : i32
    %c0_i32_1 = arith.constant 0 : i32
    return %c0_i32, %c0_i32_0 : i32, i32
  }
  func.func @transform_3(%arg0: i32) -> (i32, i32) {
    %c0_i32 = arith.constant 0 : i32
    %c0_i32_0 = arith.constant 0 : i32
    %c0_i32_1 = arith.constant 0 : i32
    return %c0_i32, %c0_i32_0 : i32, i32
  }
  func.func @transform_4(%arg0: i32) -> (i32, i32) {
    %c0_i32 = arith.constant 0 : i32
    %c0_i32_0 = arith.constant 0 : i32
    %c0_i32_1 = arith.constant 0 : i32
    return %c0_i32, %c0_i32_0 : i32, i32
  }
  func.func @transform_5(%arg0: i32) -> (i32, i32) {
    %c0_i32 = arith.constant 0 : i32
    %c0_i32_0 = arith.constant 0 : i32
    %c0_i32_1 = arith.constant 0 : i32
    return %c0_i32, %c0_i32_0 : i32, i32
  }
  func.func @transform_6(%arg0: i32) -> (i32, i32) {
    %c0_i32 = arith.constant 0 : i32
    %c0_i32_0 = arith.constant 0 : i32
    %c0_i32_1 = arith.constant 0 : i32
    return %c0_i32, %c0_i32_0 : i32, i32
  }
  func.func @transform_7(%arg0: i32) -> (i32, i32) {
    %c0_i32 = arith.constant 0 : i32
    %c0_i32_0 = arith.constant 0 : i32
    %c0_i32_1 = arith.constant 0 : i32
    return %c0_i32, %c0_i32_0 : i32, i32
  }
  func.func @transform_8(%arg0: i32) -> (i32, i32) {
    %c0_i32 = arith.constant 0 : i32
    %c0_i32_0 = arith.constant 0 : i32
    %c0_i32_1 = arith.constant 0 : i32
    return %c0_i32, %c0_i32_0 : i32, i32
  }
  func.func @transform_9(%arg0: i32) -> (i32, i32) {
    %c0_i32 = arith.constant 0 : i32
    %c0_i32_0 = arith.constant 0 : i32
    %c0_i32_1 = arith.constant 0 : i32
    return %c0_i32, %c0_i32_0 : i32, i32
  }
  func.func @transform_10(%arg0: i32) -> (i32, i32) {
    %c0_i32 = arith.constant 0 : i32
    %c0_i32_0 = arith.constant 0 : i32
    %c0_i32_1 = arith.constant 0 : i32
    return %c0_i32, %c0_i32_0 : i32, i32
  }
  func.func @transform_11(%arg0: i32) -> (i32, i32) {
    %c0_i32 = arith.constant 0 : i32
    %c0_i32_0 = arith.constant 0 : i32
    %c0_i32_1 = arith.constant 0 : i32
    return %c0_i32, %c0_i32_0 : i32, i32
  }
  func.func @transform_12(%arg0: i32) -> (i32, i32) {
    %c0_i32 = arith.constant 0 : i32
    %c0_i32_0 = arith.constant 0 : i32
    return %arg0, %c0_i32 : i32, i32
  }
}

</mosaic_0001>

<llo_original>
// kernel: _decaf_forward.1
$region0: #{_decaf_forward.1}
  #allocation0 [shape = 'u32[]', space=smem, size = 0x4, offset = 0x4, fixed_abs, tag = 'smem constant byte address 0x4 - core index']
  #allocation1 [shape = 'u32[144,128]{1,0:T(1,128)}', space=vmem, size = 0x12000, scoped, tag = 'internal scratch']
  %s0 = inlined_call_operand.vmem [shape: f32[64,38], index: 0, kind: input, shape index: {}]
  %s1 = inlined_call_operand.vmem [shape: f32[1,3], index: 1, kind: input, shape index: {}]
  %s2 = inlined_call_operand.vmem [shape: bf16[16,32], index: 2, kind: input, shape index: {}]
  %s3 = inlined_call_operand.vmem [shape: f32[1,32], index: 3, kind: input, shape index: {}]
  %s4 = inlined_call_operand.vmem [shape: bf16[32,32], index: 4, kind: input, shape index: {}]
  %s5 = inlined_call_operand.vmem [shape: f32[1,32], index: 5, kind: input, shape index: {}]
  %s6 = inlined_call_operand.vmem [shape: bf16[32,37], index: 6, kind: input, shape index: {}]
  %s7 = inlined_call_operand.vmem [shape: f32[1,37], index: 7, kind: input, shape index: {}]
  %s8 = inlined_call_operand.vmem [shape: bf16[38,128], index: 8, kind: input, shape index: {}]
  %s9 = inlined_call_operand.vmem [shape: f32[1,128], index: 9, kind: input, shape index: {}]
  %s10 = inlined_call_operand.vmem [shape: bf16[128,63], index: 10, kind: input, shape index: {}]
  %s11 = inlined_call_operand.vmem [shape: f32[1,63], index: 11, kind: input, shape index: {}]
  %s12 = inlined_call_operand.vmem [shape: f32[64,128], index: 12, kind: output, shape index: {}]
  %s13 = sld [smem:[#allocation0]]
  $region81: #{_decaf_forward.1} parent=0
    _
  %s15 = ssub.s32 1, %s13
  %s16 = scalar_select 0, %s15, %s13
  loop: start=0, step=1, limit=4
  $region2: #{_decaf_forward.1} parent=0 // loop_pre_header
    _
  $region3: #{_decaf_forward.1} parent=0 // loop_header
    %s18 = sphi 0, %s22
    %p19 = scmp.ge.s32.totalorder %s18, 4
    %s28 = sphi 0, %s30
    %s31 = sphi 0, %s28
    %s32 = sphi 0, %s31
    %s48 = sphi 0, %s32
    %s52 = sphi 0, %s52
    %s54 = sphi 0, %s52
    %s55 = sphi 0, %s54
    %s69 = sphi 0, %s55
    %s73 = sphi 0, %s73
    %s75 = sphi 0, %s73
    %s76 = sphi 0, %s75
    %s90 = sphi 0, %s76
    %s94 = sphi 0, %s94
    %s96 = sphi 0, %s94
    %s97 = sphi 0, %s96
    %s111 = sphi 0, %s97
    %s115 = sphi 0, %s115
    %s117 = sphi 0, %s115
    %s118 = sphi 0, %s117
    %s132 = sphi 0, %s118
    %s136 = sphi 0, %s136
    %s138 = sphi 0, %s136
    %s139 = sphi 0, %s138
    %s153 = sphi 0, %s139
    %s157 = sphi 0, %s157
    %s159 = sphi 0, %s157
    %s160 = sphi 0, %s159
    %s174 = sphi 0, %s160
    %s178 = sphi 0, %s178
    %s180 = sphi 0, %s178
    %s181 = sphi 0, %s180
    %s195 = sphi 0, %s181
    %s199 = sphi 0, %s199
    %s201 = sphi 0, %s199
    %s202 = sphi 0, %s201
    %s216 = sphi 0, %s202
    %s220 = sphi 0, %s220
    %s222 = sphi 0, %s220
    %s223 = sphi 0, %s222
    %s237 = sphi 0, %s223
    %s241 = sphi 0, %s241
    %s243 = sphi 0, %s241
    %s244 = sphi 0, %s243
    %s258 = sphi 0, %s244
    %s262 = sphi 0, %s262
    %s264 = sphi 0, %s262
    %s265 = sphi 0, %s264
    %s279 = sphi 0, %s265
    %s285 = sphi 0, %s287
    %s288 = sphi 0, %s285
    %s289 = sphi 0, %s288
    %s305 = sphi 0, %s289
  $region4: #{_decaf_forward.1} parent=0 // loop_header_branch
    %21 = sbr.rel (%p19) target = $region8
  $region5: #{_decaf_forward.1} parent=0 // loop_body
    %s23 = ssub.s32 %s18, 1
    %s24 = ssub.s32 %s18, 2
    %s25 = sadd.s32 %s18, 1
    %s26 = ssub.s32 %s18, %s25
    %p27 = scmp.eq.s32.totalorder %s26, 0
    %s29 = sadd.s32 %s28, 1
    %s30 = scalar_select %p27, %s28, %s29
    %p33 = pneg %p27
    %p34 = scmp.eq.s32.totalorder %s18, 1
    %p35 = por %p33, %p34
    %p36 = scmp.ne.s32.totalorder %s28, %s31
    %p37 = scmp.eq.s32.totalorder %s18, 0
    %p38 = por %p36, %p37
    %p39 = scmp.ne.s32.totalorder %s28, %s31
    %p40 = scmp.eq.s32.totalorder %s23, 1
    %p41 = por %p39, %p40
    %p42 = scmp.ne.s32.totalorder %s31, %s32
    %p43 = scmp.eq.s32.totalorder %s23, 0
    %p44 = por %p42, %p43
    %p45 = scmp.ne.s32.totalorder %s31, %s32
    %p46 = scmp.eq.s32.totalorder %s24, 1
    %p47 = por %p45, %p46
    %p49 = scmp.ne.s32.totalorder %s32, %s48
    %p50 = scmp.eq.s32.totalorder %s24, 0
    %p51 = por %p49, %p50
    %s53 = sadd.s32 %s52, 1
    %p56 = scmp.eq.s32.totalorder %s18, 1
    %p57 = scmp.ne.s32.totalorder %s52, %s54
    %p58 = scmp.eq.s32.totalorder %s18, 0
    %p59 = por %p57, %p58
    %p60 = scmp.ne.s32.totalorder %s52, %s54
    %p61 = scmp.eq.s32.totalorder %s23, 1
    %p62 = por %p60, %p61
    %p63 = scmp.ne.s32.totalorder %s54, %s55
    %p64 = scmp.eq.s32.totalorder %s23, 0
    %p65 = por %p63, %p64
    %p66 = scmp.ne.s32.totalorder %s54, %s55
    %p67 = scmp.eq.s32.totalorder %s24, 1
    %p68 = por %p66, %p67
    %p70 = scmp.ne.s32.totalorder %s55, %s69
    %p71 = scmp.eq.s32.totalorder %s24, 0
    %p72 = por %p70, %p71
    %s74 = sadd.s32 %s73, 1
    %p77 = scmp.eq.s32.totalorder %s18, 1
    %p78 = scmp.ne.s32.totalorder %s73, %s75
    %p79 = scmp.eq.s32.totalorder %s18, 0
    %p80 = por %p78, %p79
    %p81 = scmp.ne.s32.totalorder %s73, %s75
    %p82 = scmp.eq.s32.totalorder %s23, 1
    %p83 = por %p81, %p82
    %p84 = scmp.ne.s32.totalorder %s75, %s76
    %p85 = scmp.eq.s32.totalorder %s23, 0
    %p86 = por %p84, %p85
    %p87 = scmp.ne.s32.totalorder %s75, %s76
    %p88 = scmp.eq.s32.totalorder %s24, 1
    %p89 = por %p87, %p88
    %p91 = scmp.ne.s32.totalorder %s76, %s90
    %p92 = scmp.eq.s32.totalorder %s24, 0
    %p93 = por %p91, %p92
    %s95 = sadd.s32 %s94, 1
    %p98 = scmp.eq.s32.totalorder %s18, 1
    %p99 = scmp.ne.s32.totalorder %s94, %s96
    %p100 = scmp.eq.s32.totalorder %s18, 0
    %p101 = por %p99, %p100
    %p102 = scmp.ne.s32.totalorder %s94, %s96
    %p103 = scmp.eq.s32.totalorder %s23, 1
    %p104 = por %p102, %p103
    %p105 = scmp.ne.s32.totalorder %s96, %s97
    %p106 = scmp.eq.s32.totalorder %s23, 0
    %p107 = por %p105, %p106
    %p108 = scmp.ne.s32.totalorder %s96, %s97
    %p109 = scmp.eq.s32.totalorder %s24, 1
    %p110 = por %p108, %p109
    %p112 = scmp.ne.s32.totalorder %s97, %s111
    %p113 = scmp.eq.s32.totalorder %s24, 0
    %p114 = por %p112, %p113
    %s116 = sadd.s32 %s115, 1
    %p119 = scmp.eq.s32.totalorder %s18, 1
    %p120 = scmp.ne.s32.totalorder %s115, %s117
    %p121 = scmp.eq.s32.totalorder %s18, 0
    %p122 = por %p120, %p121
    %p123 = scmp.ne.s32.totalorder %s115, %s117
    %p124 = scmp.eq.s32.totalorder %s23, 1
    %p125 = por %p123, %p124
    %p126 = scmp.ne.s32.totalorder %s117, %s118
    %p127 = scmp.eq.s32.totalorder %s23, 0
    %p128 = por %p126, %p127
    %p129 = scmp.ne.s32.totalorder %s117, %s118
    %p130 = scmp.eq.s32.totalorder %s24, 1
    %p131 = por %p129, %p130
    %p133 = scmp.ne.s32.totalorder %s118, %s132
    %p134 = scmp.eq.s32.totalorder %s24, 0
    %p135 = por %p133, %p134
    %s137 = sadd.s32 %s136, 1
    %p140 = scmp.eq.s32.totalorder %s18, 1
    %p141 = scmp.ne.s32.totalorder %s136, %s138
    %p142 = scmp.eq.s32.totalorder %s18, 0
    %p143 = por %p141, %p142
    %p144 = scmp.ne.s32.totalorder %s136, %s138
    %p145 = scmp.eq.s32.totalorder %s23, 1
    %p146 = por %p144, %p145
    %p147 = scmp.ne.s32.totalorder %s138, %s139
    %p148 = scmp.eq.s32.totalorder %s23, 0
    %p149 = por %p147, %p148
    %p150 = scmp.ne.s32.totalorder %s138, %s139
    %p151 = scmp.eq.s32.totalorder %s24, 1
    %p152 = por %p150, %p151
    %p154 = scmp.ne.s32.totalorder %s139, %s153
    %p155 = scmp.eq.s32.totalorder %s24, 0
    %p156 = por %p154, %p155
    %s158 = sadd.s32 %s157, 1
    %p161 = scmp.eq.s32.totalorder %s18, 1
    %p162 = scmp.ne.s32.totalorder %s157, %s159
    %p163 = scmp.eq.s32.totalorder %s18, 0
    %p164 = por %p162, %p163
    %p165 = scmp.ne.s32.totalorder %s157, %s159
    %p166 = scmp.eq.s32.totalorder %s23, 1
    %p167 = por %p165, %p166
    %p168 = scmp.ne.s32.totalorder %s159, %s160
    %p169 = scmp.eq.s32.totalorder %s23, 0
    %p170 = por %p168, %p169
    %p171 = scmp.ne.s32.totalorder %s159, %s160
    %p172 = scmp.eq.s32.totalorder %s24, 1
    %p173 = por %p171, %p172
    %p175 = scmp.ne.s32.totalorder %s160, %s174
    %p176 = scmp.eq.s32.totalorder %s24, 0
    %p177 = por %p175, %p176
    %s179 = sadd.s32 %s178, 1
    %p182 = scmp.eq.s32.totalorder %s18, 1
    %p183 = scmp.ne.s32.totalorder %s178, %s180
    %p184 = scmp.eq.s32.totalorder %s18, 0
    %p185 = por %p183, %p184
    %p186 = scmp.ne.s32.totalorder %s178, %s180
    %p187 = scmp.eq.s32.totalorder %s23, 1
    %p188 = por %p186, %p187
    %p189 = scmp.ne.s32.totalorder %s180, %s181
    %p190 = scmp.eq.s32.totalorder %s23, 0
    %p191 = por %p189, %p190
    %p192 = scmp.ne.s32.totalorder %s180, %s181
    %p193 = scmp.eq.s32.totalorder %s24, 1
    %p194 = por %p192, %p193
    %p196 = scmp.ne.s32.totalorder %s181, %s195
    %p197 = scmp.eq.s32.totalorder %s24, 0
    %p198 = por %p196, %p197
    %s200 = sadd.s32 %s199, 1
    %p203 = scmp.eq.s32.totalorder %s18, 1
    %p204 = scmp.ne.s32.totalorder %s199, %s201
    %p205 = scmp.eq.s32.totalorder %s18, 0
    %p206 = por %p204, %p205
    %p207 = scmp.ne.s32.totalorder %s199, %s201
    %p208 = scmp.eq.s32.totalorder %s23, 1
    %p209 = por %p207, %p208
    %p210 = scmp.ne.s32.totalorder %s201, %s202
    %p211 = scmp.eq.s32.totalorder %s23, 0
    %p212 = por %p210, %p211
    %p213 = scmp.ne.s32.totalorder %s201, %s202
    %p214 = scmp.eq.s32.totalorder %s24, 1
    %p215 = por %p213, %p214
    %p217 = scmp.ne.s32.totalorder %s202, %s216
    %p218 = scmp.eq.s32.totalorder %s24, 0
    %p219 = por %p217, %p218
    %s221 = sadd.s32 %s220, 1
    %p224 = scmp.eq.s32.totalorder %s18, 1
    %p225 = scmp.ne.s32.totalorder %s220, %s222
    %p226 = scmp.eq.s32.totalorder %s18, 0
    %p227 = por %p225, %p226
    %p228 = scmp.ne.s32.totalorder %s220, %s222
    %p229 = scmp.eq.s32.totalorder %s23, 1
    %p230 = por %p228, %p229
    %p231 = scmp.ne.s32.totalorder %s222, %s223
    %p232 = scmp.eq.s32.totalorder %s23, 0
    %p233 = por %p231, %p232
    %p234 = scmp.ne.s32.totalorder %s222, %s223
    %p235 = scmp.eq.s32.totalorder %s24, 1
    %p236 = por %p234, %p235
    %p238 = scmp.ne.s32.totalorder %s223, %s237
    %p239 = scmp.eq.s32.totalorder %s24, 0
    %p240 = por %p238, %p239
    %s242 = sadd.s32 %s241, 1
    %p245 = scmp.eq.s32.totalorder %s18, 1
    %p246 = scmp.ne.s32.totalorder %s241, %s243
    %p247 = scmp.eq.s32.totalorder %s18, 0
    %p248 = por %p246, %p247
    %p249 = scmp.ne.s32.totalorder %s241, %s243
    %p250 = scmp.eq.s32.totalorder %s23, 1
    %p251 = por %p249, %p250
    %p252 = scmp.ne.s32.totalorder %s243, %s244
    %p253 = scmp.eq.s32.totalorder %s23, 0
    %p254 = por %p252, %p253
    %p255 = scmp.ne.s32.totalorder %s243, %s244
    %p256 = scmp.eq.s32.totalorder %s24, 1
    %p257 = por %p255, %p256
    %p259 = scmp.ne.s32.totalorder %s244, %s258
    %p260 = scmp.eq.s32.totalorder %s24, 0
    %p261 = por %p259, %p260
    %s263 = sadd.s32 %s262, 1
    %p266 = scmp.eq.s32.totalorder %s18, 1
    %p267 = scmp.ne.s32.totalorder %s262, %s264
    %p268 = scmp.eq.s32.totalorder %s18, 0
    %p269 = por %p267, %p268
    %p270 = scmp.ne.s32.totalorder %s262, %s264
    %p271 = scmp.eq.s32.totalorder %s23, 1
    %p272 = por %p270, %p271
    %p273 = scmp.ne.s32.totalorder %s264, %s265
    %p274 = scmp.eq.s32.totalorder %s23, 0
    %p275 = por %p273, %p274
    %p276 = scmp.ne.s32.totalorder %s264, %s265
    %p277 = scmp.eq.s32.totalorder %s24, 1
    %p278 = por %p276, %p277
    %p280 = scmp.ne.s32.totalorder %s265, %s279
    %p281 = scmp.eq.s32.totalorder %s24, 0
    %p282 = por %p280, %p281
    %s283 = ssub.s32 %s18, %s25
    %p284 = scmp.eq.s32.totalorder %s283, 0
    %s286 = sadd.s32 %s285, 1
    %s287 = scalar_select %p284, %s285, %s286
    %p290 = pneg %p284
    %p291 = scmp.eq.s32.totalorder %s18, 1
    %p292 = por %p290, %p291
    %p293 = scmp.ne.s32.totalorder %s285, %s288
    %p294 = scmp.eq.s32.totalorder %s18, 0
    %p295 = por %p293, %p294
    %p296 = scmp.ne.s32.totalorder %s285, %s288
    %p297 = scmp.eq.s32.totalorder %s23, 1
    %p298 = por %p296, %p297
    %p299 = scmp.ne.s32.totalorder %s288, %s289
    %p300 = scmp.eq.s32.totalorder %s23, 0
    %p301 = por %p299, %p300
    %p302 = scmp.ne.s32.totalorder %s288, %s289
    %p303 = scmp.eq.s32.totalorder %s24, 1
    %p304 = por %p302, %p303
    %p306 = scmp.ne.s32.totalorder %s289, %s305
    %p307 = scmp.eq.s32.totalorder %s24, 0
    %p308 = por %p306, %p307
    %p309 = scmp.le.s32.totalorder 1, %s18
    %p310 = scmp.lt.s32.totalorder %s18, 3
    %p311 = pnand %p309, %p310
    %p312 = pneg %p311
    // Predicated region
    $region9: #{_decaf_forward.1} parent=5 // pred_check
      _
    $region10: #{_decaf_forward.1} parent=5 // pred_check_branch
      %314 = sbr.rel (%p311) target = $region12
    $region11: #{_decaf_forward.1} parent=5 // pred_region
      %s315 = ssub.s32 %s18, 1
      // Predicated region
      $region13: #{_decaf_forward.1} parent=11 // pred_check
        %p316 = pneg %p65
      $region14: #{_decaf_forward.1} parent=11 // pred_check_branch
        %318 = sbr.rel (%p316) target = $region16
      $region15: #{_decaf_forward.1} parent=11 // pred_region
        _
      $region16: #{_decaf_forward.1} parent=11 // pred_fallthru
        _
      // Predicated region
      $region17: #{_decaf_forward.1} parent=11 // pred_check
        %p319 = pneg %p86
      $region18: #{_decaf_forward.1} parent=11 // pred_check_branch
        %321 = sbr.rel (%p319) target = $region20
      $region19: #{_decaf_forward.1} parent=11 // pred_region
        _
      $region20: #{_decaf_forward.1} parent=11 // pred_fallthru
        _
      // Predicated region
      $region21: #{_decaf_forward.1} parent=11 // pred_check
        %p322 = pneg %p107
      $region22: #{_decaf_forward.1} parent=11 // pred_check_branch
        %324 = sbr.rel (%p322) target = $region24
      $region23: #{_decaf_forward.1} parent=11 // pred_region
        _
      $region24: #{_decaf_forward.1} parent=11 // pred_fallthru
        _
      // Predicated region
      $region25: #{_decaf_forward.1} parent=11 // pred_check
        %p325 = pneg %p128
      $region26: #{_decaf_forward.1} parent=11 // pred_check_branch
        %327 = sbr.rel (%p325) target = $region28
      $region27: #{_decaf_forward.1} parent=11 // pred_region
        _
      $region28: #{_decaf_forward.1} parent=11 // pred_fallthru
        _
      // Predicated region
      $region29: #{_decaf_forward.1} parent=11 // pred_check
        %p328 = pneg %p149
      $region30: #{_decaf_forward.1} parent=11 // pred_check_branch
        %330 = sbr.rel (%p328) target = $region32
      $region31: #{_decaf_forward.1} parent=11 // pred_region
        _
      $region32: #{_decaf_forward.1} parent=11 // pred_fallthru
        _
      // Predicated region
      $region33: #{_decaf_forward.1} parent=11 // pred_check
        %p331 = pneg %p170
      $region34: #{_decaf_forward.1} parent=11 // pred_check_branch
        %333 = sbr.rel (%p331) target = $region36
      $region35: #{_decaf_forward.1} parent=11 // pred_region
        _
      $region36: #{_decaf_forward.1} parent=11 // pred_fallthru
        _
      // Predicated region
      $region37: #{_decaf_forward.1} parent=11 // pred_check
        %p334 = pneg %p191
      $region38: #{_decaf_forward.1} parent=11 // pred_check_branch
        %336 = sbr.rel (%p334) target = $region40
      $region39: #{_decaf_forward.1} parent=11 // pred_region
        _
      $region40: #{_decaf_forward.1} parent=11 // pred_fallthru
        _
      // Predicated region
      $region41: #{_decaf_forward.1} parent=11 // pred_check
        %p337 = pneg %p212
      $region42: #{_decaf_forward.1} parent=11 // pred_check_branch
        %339 = sbr.rel (%p337) target = $region44
      $region43: #{_decaf_forward.1} parent=11 // pred_region
        _
      $region44: #{_decaf_forward.1} parent=11 // pred_fallthru
        _
      // Predicated region
      $region45: #{_decaf_forward.1} parent=11 // pred_check
        %p340 = pneg %p233
      $region46: #{_decaf_forward.1} parent=11 // pred_check_branch
        %342 = sbr.rel (%p340) target = $region48
      $region47: #{_decaf_forward.1} parent=11 // pred_region
        _
      $region48: #{_decaf_forward.1} parent=11 // pred_fallthru
        _
      // Predicated region
      $region49: #{_decaf_forward.1} parent=11 // pred_check
        %p343 = pneg %p254
      $region50: #{_decaf_forward.1} parent=11 // pred_check_branch
        %345 = sbr.rel (%p343) target = $region52
      $region51: #{_decaf_forward.1} parent=11 // pred_region
        _
      $region52: #{_decaf_forward.1} parent=11 // pred_fallthru
        _
      // Predicated region
      $region53: #{_decaf_forward.1} parent=11 // pred_check
        %p346 = pneg %p275
      $region54: #{_decaf_forward.1} parent=11 // pred_check_branch
        %348 = sbr.rel (%p346) target = $region56
      $region55: #{_decaf_forward.1} parent=11 // pred_region
        _
      $region56: #{_decaf_forward.1} parent=11 // pred_fallthru
        _
    $region12: #{_decaf_forward.1} parent=5 // pred_fallthru
      _
    %p349 = scmp.lt.s32.totalorder %s18, 2
    // Predicated region
    $region57: #{_decaf_forward.1} parent=5 // pred_check
      %p350 = pneg %p349
    $region58: #{_decaf_forward.1} parent=5 // pred_check_branch
      %352 = sbr.rel (%p350) target = $region60
    $region59: #{_decaf_forward.1} parent=5 // pred_region
      // Predicated region
      $region61: #{_decaf_forward.1} parent=59 // pred_check
        %p353 = pneg %p38
      $region62: #{_decaf_forward.1} parent=59 // pred_check_branch
        %355 = sbr.rel (%p353) target = $region64
      $region63: #{_decaf_forward.1} parent=59 // pred_region
        %s356 = smul.u32 4, %s18
        %p357 = scmp.lt.s32.totalorder %s356, 7
        %s358 = scalar_select %p357, %s356, 7
        %s359 = smul.addr %s358, 8
        %s360 = scalar_lea.vmem %s0, %s359
        %s361 = smul.u32 4, %s18
      $region64: #{_decaf_forward.1} parent=59 // pred_fallthru
        _
    $region60: #{_decaf_forward.1} parent=5 // pred_fallthru
      _
    %p362 = scmp.le.s32.totalorder 1, %s18
    %p363 = scmp.lt.s32.totalorder %s18, 3
    %p364 = pnand %p362, %p363
    %p365 = pneg %p364
    // Predicated region
    $region65: #{_decaf_forward.1} parent=5 // pred_check
      _
    $region66: #{_decaf_forward.1} parent=5 // pred_check_branch
      %367 = sbr.rel (%p364) target = $region68
    $region67: #{_decaf_forward.1} parent=5 // pred_region
      %s368 = ssub.s32 %s18, 1
      %s369 = smul.u32 4, %s23
      %p370 = scmp.lt.s32.totalorder %s369, 7
      %s371 = scalar_select %p370, %s369, 7
      %s372 = smul.addr %s371, 8
      %s373 = scalar_lea.vmem %s0, %s372
      %p374 = pneg %p44
      %p375 = pneg %p41
      %p376 = pneg %p65
      %p377 = pneg %p62
      %p378 = pneg %p86
      %p379 = pneg %p83
      %p380 = pneg %p107
      %p381 = pneg %p104
      %p382 = pneg %p128
      %p383 = pneg %p125
      %p384 = pneg %p149
      %p385 = pneg %p146
      %p386 = pneg %p170
      %p387 = pneg %p167
      %p388 = pneg %p191
      %p389 = pneg %p188
      %p390 = pneg %p212
      %p391 = pneg %p209
      %p392 = pneg %p233
      %p393 = pneg %p230
      %p394 = pneg %p254
      %p395 = pneg %p251
      %p396 = pneg %p275
      %p397 = pneg %p272
      %p398 = pneg %p301
      %p399 = pneg %p298
      %s400 = smul.u32 4, %s23
      %p401 = scmp.lt.s32.totalorder %s400, 7
      %s402 = scalar_select %p401, %s400, 7
      %s403 = smul.addr %s402, 8
      %s404 = scalar_lea.vmem %s12, %s403
      %s405 = smul.u32 4, %s23
      %p406 = scmp.lt.s32.totalorder %s405, 7
      %s407 = scalar_select %p406, %s405, 7
      %s408 = smul.addr %s407, 8
      %s409 = scalar_lea.vmem %s0, %s408
      %s410 = smul.u32 4, %s23
      %s411 = smul.u32 4, %s23
      %p412 = scmp.lt.s32.totalorder %s411, 7
      %s413 = scalar_select %p412, %s411, 7
      %s414 = smul.addr %s413, 8
      %s415 = scalar_lea.vmem %s12, %s414
      %s416 = smul.u32 4, %s23
      %v418 = vld [vmem:[%s409] sm:$0xff]
      %v419 = vld [vmem:[%s409 + $0x8] sm:$0xff]
      %v420 = vld [vmem:[%s409 + $0x10] sm:$0xff]
      %v421 = vld [vmem:[%s409 + $0x18] sm:$0xff]
      %v422 = vpack.c.bf16 %v419, %v418
      %v423 = vpack.c.bf16 %v421, %v420
      %v424 = vld [vmem:[%s2] sm:$0xf]
      %v425 = vld [vmem:[%s2 + $0x4] sm:$0xf]
      %v426 = vld [vmem:[%s3] sm:$0x1]
      %v428 = vlaneseq
      %v429 = vshrl.u32 %v428, 7
      %v430 = vsub.s32 0, %v429
      %v431 = vrot.slane %v426, %v430
      %v435 = vunpack.c.l.b16 %v424
      %v436 = vunpack.c.l.b16 %v425
      %v437 = vpack.c.b16 %v436, %v435
      %vm439 = vcmask 130048
      %v441 = vsel %vm439, %v422, 0
      %v444 = vsel %vm439, %v423, 0
      %446 = vmatprep.subr.bf16.mxu0 0
      %447 = vmatpush1.bf16.msra.mxu0 %v437
      %448 = vmatprep.subr.bf16.mxu0 0
      %449 = vmatpush1.bf16.msra.mxu0 0
      %450 = vmatprep.subr.bf16.mxu0 0
      %451 = vmatpush1.bf16.msra.mxu0 0
      %452 = vmatprep.subr.bf16.mxu0 0
      %453 = vmatpush1.bf16.msra.mxu0 0
      %454 = vmatprep.subr.bf16.mxu0 0
      %455 = vmatpush1.bf16.msra.mxu0 0
      %456 = vmatprep.subr.bf16.mxu0 0
      %457 = vmatpush1.bf16.msra.mxu0 0
      %458 = vmatprep.subr.bf16.mxu0 0
      %459 = vmatpush1.bf16.msra.mxu0 0
      %460 = vmatprep.subr.bf16.mxu0 0
      %461 = vmatpush1.bf16.msra.mxu0 0
      %462 = vmatprep.subr.bf16.mxu0 0
      %463 = vmatpush1.bf16.msra.mxu0 0
      %464 = vmatprep.subr.bf16.mxu0 0
      %465 = vmatpush1.bf16.msra.mxu0 0
      %466 = vmatprep.subr.bf16.mxu0 0
      %467 = vmatpush1.bf16.msra.mxu0 0
      %468 = vmatprep.subr.bf16.mxu0 0
      %469 = vmatpush1.bf16.msra.mxu0 0
      %470 = vmatprep.subr.bf16.mxu0 0
      %471 = vmatpush1.bf16.msra.mxu0 0
      %472 = vmatprep.subr.bf16.mxu0 0
      %473 = vmatpush1.bf16.msra.mxu0 0
      %474 = vmatprep.subr.bf16.mxu0 0
      %475 = vmatpush1.bf16.msra.mxu0 0
      %476 = vmatprep.subr.bf16.mxu0 0
      %477 = vmatpush1.bf16.msra.mxu0 0
      %478 = vmatprep.mubr.bf16.mxu0 0
      %479 = vmatmul.mubr.bf16.gmra.mrb[0].mxu0 %v441
      %v480 = vpop.f32.mrb[0].mxu0
      %v481 = vadd.f32 %v431, %v480
      %v482 = vpop.f32.mrb[0].mxu0
      %v483 = vpop.f32.mrb[0].mxu0
      %v484 = vadd.f32 %v431, %v483
      %v485 = vpop.f32.mrb[0].mxu0
      %486 = vmatprep.mubr.bf16.mxu0 0
      %487 = vmatmul.mubr.bf16.gmra.mrb[0].mxu0 %v444
      %v488 = vpop.f32.mrb[0].mxu0
      %v489 = vadd.f32 %v431, %v488
      %v490 = vpop.f32.mrb[0].mxu0
      %v491 = vpop.f32.mrb[0].mxu0
      %v492 = vadd.f32 %v431, %v491
      %v493 = vpop.f32.mrb[0].mxu0
      %494 = vdwg.mxu0
      %v495 = vmax.f32 %v481, 0.0
      %v496 = vmax.f32 %v484, 0.0
      %v497 = vmax.f32 %v489, 0.0
      %v498 = vmax.f32 %v492, 0.0
      %v499 = vpack.c.bf16 %v496, %v495
      %v500 = vpack.c.bf16 %v498, %v497
      %v501 = vld [vmem:[%s4] sm:$0xf]
      %v502 = vld [vmem:[%s4 + $0x4] sm:$0xf]
      %v503 = vld [vmem:[%s4 + $0x8] sm:$0xf]
      %v504 = vld [vmem:[%s4 + $0xc] sm:$0xf]
      %v505 = vld [vmem:[%s5] sm:$0x1]
      %v507 = vlaneseq
      %v508 = vshrl.u32 %v507, 7
      %v509 = vsub.s32 0, %v508
      %v510 = vrot.slane %v505, %v509
      %v516 = vunpack.c.l.b16 %v501
      %v517 = vunpack.c.l.b16 %v502
      %v518 = vunpack.c.l.b16 %v503
      %v519 = vunpack.c.l.b16 %v504
      %v520 = vpack.c.b16 %v517, %v516
      %v521 = vpack.c.b16 %v519, %v518
      %vm524 = vcmask 261120
      %v526 = vsel %vm524, %v499, 0
      %v529 = vsel %vm524, %v500, 0
      %531 = vmatprep.subr.bf16.mxu0 0
      %532 = vmatpush1.bf16.msra.mxu0 %v520
      %533 = vmatprep.subr.bf16.mxu0 0
      %534 = vmatpush1.bf16.msra.mxu0 %v521
      %535 = vmatprep.subr.bf16.mxu0 0
      %536 = vmatpush1.bf16.msra.mxu0 0
      %537 = vmatprep.subr.bf16.mxu0 0
      %538 = vmatpush1.bf16.msra.mxu0 0
      %539 = vmatprep.subr.bf16.mxu0 0
      %540 = vmatpush1.bf16.msra.mxu0 0
      %541 = vmatprep.subr.bf16.mxu0 0
      %542 = vmatpush1.bf16.msra.mxu0 0
      %543 = vmatprep.subr.bf16.mxu0 0
      %544 = vmatpush1.bf16.msra.mxu0 0
      %545 = vmatprep.subr.bf16.mxu0 0
      %546 = vmatpush1.bf16.msra.mxu0 0
      %547 = vmatprep.subr.bf16.mxu0 0
      %548 = vmatpush1.bf16.msra.mxu0 0
      %549 = vmatprep.subr.bf16.mxu0 0
      %550 = vmatpush1.bf16.msra.mxu0 0
      %551 = vmatprep.subr.bf16.mxu0 0
      %552 = vmatpush1.bf16.msra.mxu0 0
      %553 = vmatprep.subr.bf16.mxu0 0
      %554 = vmatpush1.bf16.msra.mxu0 0
      %555 = vmatprep.subr.bf16.mxu0 0
      %556 = vmatpush1.bf16.msra.mxu0 0
      %557 = vmatprep.subr.bf16.mxu0 0
      %558 = vmatpush1.bf16.msra.mxu0 0
      %559 = vmatprep.subr.bf16.mxu0 0
      %560 = vmatpush1.bf16.msra.mxu0 0
      %561 = vmatprep.subr.bf16.mxu0 0
      %562 = vmatpush1.bf16.msra.mxu0 0
      %563 = vmatprep.mubr.bf16.mxu0 0
      %564 = vmatmul.mubr.bf16.gmra.mrb[0].mxu0 %v526
      %v565 = vpop.f32.mrb[0].mxu0
      %v566 = vadd.f32 %v510, %v565
      %v567 = vpop.f32.mrb[0].mxu0
      %v568 = vpop.f32.mrb[0].mxu0
      %v569 = vadd.f32 %v510, %v568
      %v570 = vpop.f32.mrb[0].mxu0
      %571 = vmatprep.mubr.bf16.mxu0 0
      %572 = vmatmul.mubr.bf16.gmra.mrb[0].mxu0 %v529
      %v573 = vpop.f32.mrb[0].mxu0
      %v574 = vadd.f32 %v510, %v573
      %v575 = vpop.f32.mrb[0].mxu0
      %v576 = vpop.f32.mrb[0].mxu0
      %v577 = vadd.f32 %v510, %v576
      %v578 = vpop.f32.mrb[0].mxu0
      %579 = vdwg.mxu0
      %v580 = vmax.f32 %v566, 0.0
      %v581 = vmax.f32 %v569, 0.0
      %v582 = vmax.f32 %v574, 0.0
      %v583 = vmax.f32 %v577, 0.0
      %v584 = vpack.c.bf16 %v581, %v580
      %v585 = vpack.c.bf16 %v583, %v582
      %v586 = vld [vmem:[%s6] sm:$0xf]
      %v587 = vld [vmem:[%s6 + $0x4] sm:$0xf]
      %v588 = vld [vmem:[%s6 + $0x8] sm:$0xf]
      %v589 = vld [vmem:[%s6 + $0xc] sm:$0xf]
      %v590 = vld [vmem:[%s7] sm:$0x1]
      %v592 = vlaneseq
      %v593 = vshrl.u32 %v592, 7
      %v594 = vsub.s32 0, %v593
      %v595 = vrot.slane %v590, %v594
      %v601 = vunpack.c.l.b16 %v586
      %v602 = vunpack.c.l.b16 %v587
      %v603 = vunpack.c.l.b16 %v588
      %v604 = vunpack.c.l.b16 %v589
      %v605 = vpack.c.b16 %v602, %v601
      %v606 = vpack.c.b16 %v604, %v603
      %v610 = vsel %vm524, %v584, 0
      %v613 = vsel %vm524, %v585, 0
      %615 = vmatprep.subr.bf16.mxu0 0
      %616 = vmatpush1.bf16.msra.mxu0 %v605
      %617 = vmatprep.subr.bf16.mxu0 0
      %618 = vmatpush1.bf16.msra.mxu0 %v606
      %619 = vmatprep.subr.bf16.mxu0 0
      %620 = vmatpush1.bf16.msra.mxu0 0
      %621 = vmatprep.subr.bf16.mxu0 0
      %622 = vmatpush1.bf16.msra.mxu0 0
      %623 = vmatprep.subr.bf16.mxu0 0
      %624 = vmatpush1.bf16.msra.mxu0 0
      %625 = vmatprep.subr.bf16.mxu0 0
      %626 = vmatpush1.bf16.msra.mxu0 0
      %627 = vmatprep.subr.bf16.mxu0 0
      %628 = vmatpush1.bf16.msra.mxu0 0
      %629 = vmatprep.subr.bf16.mxu0 0
      %630 = vmatpush1.bf16.msra.mxu0 0
      %631 = vmatprep.subr.bf16.mxu0 0
      %632 = vmatpush1.bf16.msra.mxu0 0
      %633 = vmatprep.subr.bf16.mxu0 0
      %634 = vmatpush1.bf16.msra.mxu0 0
      %635 = vmatprep.subr.bf16.mxu0 0
      %636 = vmatpush1.bf16.msra.mxu0 0
      %637 = vmatprep.subr.bf16.mxu0 0
      %638 = vmatpush1.bf16.msra.mxu0 0
      %639 = vmatprep.subr.bf16.mxu0 0
      %640 = vmatpush1.bf16.msra.mxu0 0
      %641 = vmatprep.subr.bf16.mxu0 0
      %642 = vmatpush1.bf16.msra.mxu0 0
      %643 = vmatprep.subr.bf16.mxu0 0
      %644 = vmatpush1.bf16.msra.mxu0 0
      %645 = vmatprep.subr.bf16.mxu0 0
      %646 = vmatpush1.bf16.msra.mxu0 0
      %647 = vmatprep.mubr.bf16.mxu0 0
      %648 = vmatmul.mubr.bf16.gmra.mrb[0].mxu0 %v610
      %v649 = vpop.f32.mrb[0].mxu0
      %v650 = vadd.f32 %v595, %v649
      %v651 = vpop.f32.mrb[0].mxu0
      %v652 = vpop.f32.mrb[0].mxu0
      %v653 = vadd.f32 %v595, %v652
      %v654 = vpop.f32.mrb[0].mxu0
      %655 = vmatprep.mubr.bf16.mxu0 0
      %656 = vmatmul.mubr.bf16.gmra.mrb[0].mxu0 %v613
      %v657 = vpop.f32.mrb[0].mxu0
      %v658 = vadd.f32 %v595, %v657
      %v659 = vpop.f32.mrb[0].mxu0
      %v660 = vpop.f32.mrb[0].mxu0
      %v661 = vadd.f32 %v595, %v660
      %v662 = vpop.f32.mrb[0].mxu0
      %663 = vdwg.mxu0
      %v664 = vadd.f32 %v418, %v650
      %v665 = vadd.f32 %v419, %v653
      %v666 = vadd.f32 %v420, %v658
      %v667 = vadd.f32 %v421, %v661
      %v668 = vmul.f32 %v664, 1.442695
      %v669 = vpow.pop %v668
      %v670 = vmul.f32 %v665, 1.442695
      %v671 = vpow.pop %v670
      %v672 = vmul.f32 %v666, 1.442695
      %v673 = vpow.pop %v672
      %v674 = vmul.f32 %v667, 1.442695
      %v675 = vpow.pop %v674
      %680 = vrot.lane.b32.xlu0 %v664, 112
      %v681 = vpop.permute.xlu0 %680
      %682 = vrot.lane.b32.xlu0 %v665, 112
      %v683 = vpop.permute.xlu0 %682
      %684 = vrot.lane.b32.xlu0 %v666, 112
      %v685 = vpop.permute.xlu0 %684
      %686 = vrot.lane.b32.xlu0 %v667, 112
      %v687 = vpop.permute.xlu0 %686
      %692 = vrot.lane.b32.xlu0 %v664, 115
      %v693 = vpop.permute.xlu0 %692
      %694 = vrot.lane.b32.xlu0 %v665, 115
      %v695 = vpop.permute.xlu0 %694
      %696 = vrot.lane.b32.xlu0 %v666, 115
      %v697 = vpop.permute.xlu0 %696
      %698 = vrot.lane.b32.xlu0 %v667, 115
      %v699 = vpop.permute.xlu0 %698
      %704 = vrot.lane.b32.xlu0 %v664, 118
      %v705 = vpop.permute.xlu0 %704
      %706 = vrot.lane.b32.xlu0 %v665, 118
      %v707 = vpop.permute.xlu0 %706
      %708 = vrot.lane.b32.xlu0 %v666, 118
      %v709 = vpop.permute.xlu0 %708
      %710 = vrot.lane.b32.xlu0 %v667, 118
      %v711 = vpop.permute.xlu0 %710
      %716 = vrot.lane.b32.xlu0 %v664, 121
      %v717 = vpop.permute.xlu0 %716
      %718 = vrot.lane.b32.xlu0 %v665, 121
      %v719 = vpop.permute.xlu0 %718
      %720 = vrot.lane.b32.xlu0 %v666, 121
      %v721 = vpop.permute.xlu0 %720
      %722 = vrot.lane.b32.xlu0 %v667, 121
      %v723 = vpop.permute.xlu0 %722
      %vm728 = vcmask 23552
      %v729 = vsel %vm728, %v681, %v693
      %v730 = vsel %vm728, %v683, %v695
      %v731 = vsel %vm728, %v685, %v697
      %v732 = vsel %vm728, %v687, %v699
      %vm733 = vcmask 48128
      %v734 = vsel %vm733, %v729, %v705
      %v735 = vsel %vm733, %v730, %v707
      %v736 = vsel %vm733, %v731, %v709
      %v737 = vsel %vm733, %v732, %v711
      %vm738 = vcmask 72704
      %v739 = vsel %vm738, %v734, %v717
      %v740 = vsel %vm738, %v735, %v719
      %v741 = vsel %vm738, %v736, %v721
      %v742 = vsel %vm738, %v737, %v723
      %747 = vrot.lane.b32.xlu0 %v669, 97
      %v748 = vpop.permute.xlu0 %747
      %749 = vrot.lane.b32.xlu0 %v671, 97
      %v750 = vpop.permute.xlu0 %749
      %751 = vrot.lane.b32.xlu0 %v673, 97
      %v752 = vpop.permute.xlu0 %751
      %753 = vrot.lane.b32.xlu0 %v675, 97
      %v754 = vpop.permute.xlu0 %753
      %759 = vrot.lane.b32.xlu0 %v669, 100
      %v760 = vpop.permute.xlu0 %759
      %761 = vrot.lane.b32.xlu0 %v671, 100
      %v762 = vpop.permute.xlu0 %761
      %763 = vrot.lane.b32.xlu0 %v673, 100
      %v764 = vpop.permute.xlu0 %763
      %765 = vrot.lane.b32.xlu0 %v675, 100
      %v766 = vpop.permute.xlu0 %765
      %771 = vrot.lane.b32.xlu0 %v669, 103
      %v772 = vpop.permute.xlu0 %771
      %773 = vrot.lane.b32.xlu0 %v671, 103
      %v774 = vpop.permute.xlu0 %773
      %775 = vrot.lane.b32.xlu0 %v673, 103
      %v776 = vpop.permute.xlu0 %775
      %777 = vrot.lane.b32.xlu0 %v675, 103
      %v778 = vpop.permute.xlu0 %777
      %783 = vrot.lane.b32.xlu0 %v669, 106
      %v784 = vpop.permute.xlu0 %783
      %785 = vrot.lane.b32.xlu0 %v671, 106
      %v786 = vpop.permute.xlu0 %785
      %787 = vrot.lane.b32.xlu0 %v673, 106
      %v788 = vpop.permute.xlu0 %787
      %789 = vrot.lane.b32.xlu0 %v675, 106
      %v790 = vpop.permute.xlu0 %789
      %v795 = vsel %vm728, %v748, %v760
      %v796 = vsel %vm728, %v750, %v762
      %v797 = vsel %vm728, %v752, %v764
      %v798 = vsel %vm728, %v754, %v766
      %v799 = vsel %vm733, %v795, %v772
      %v800 = vsel %vm733, %v796, %v774
      %v801 = vsel %vm733, %v797, %v776
      %v802 = vsel %vm733, %v798, %v778
      %v803 = vsel %vm738, %v799, %v784
      %v804 = vsel %vm738, %v800, %v786
      %v805 = vsel %vm738, %v801, %v788
      %v806 = vsel %vm738, %v802, %v790
      %811 = vrot.lane.b32.xlu0 %v803, 19
      %v812 = vpop.permute.xlu0 %811
      %813 = vrot.lane.b32.xlu0 %v804, 19
      %v814 = vpop.permute.xlu0 %813
      %815 = vrot.lane.b32.xlu0 %v805, 19
      %v816 = vpop.permute.xlu0 %815
      %817 = vrot.lane.b32.xlu0 %v806, 19
      %v818 = vpop.permute.xlu0 %817
      %v823 = vmul.f32 %v664, %v812
      %v824 = vmul.f32 %v665, %v814
      %v825 = vmul.f32 %v666, %v816
      %v826 = vmul.f32 %v667, %v818
      %831 = vrot.lane.b32.xlu0 %v823, 109
      %v832 = vpop.permute.xlu0 %831
      %833 = vrot.lane.b32.xlu0 %v824, 109
      %v834 = vpop.permute.xlu0 %833
      %835 = vrot.lane.b32.xlu0 %v825, 109
      %v836 = vpop.permute.xlu0 %835
      %837 = vrot.lane.b32.xlu0 %v826, 109
      %v838 = vpop.permute.xlu0 %837
      %v843 = vadd.f32 %v739, %v832
      %v844 = vadd.f32 %v740, %v834
      %v845 = vadd.f32 %v741, %v836
      %v846 = vadd.f32 %v742, %v838
      %v847 = vld [vmem:[%s1] sm:$0x1]
      %v849 = vlaneseq
      %v850 = vshrl.u32 %v849, 7
      %v851 = vsub.s32 0, %v850
      %v852 = vrot.slane %v847, %v851
      %858 = vrot.lane.b32.xlu0 %v418, 112
      %v859 = vpop.permute.xlu0 %858
      %860 = vrot.lane.b32.xlu0 %v419, 112
      %v861 = vpop.permute.xlu0 %860
      %862 = vrot.lane.b32.xlu0 %v420, 112
      %v863 = vpop.permute.xlu0 %862
      %864 = vrot.lane.b32.xlu0 %v421, 112
      %v865 = vpop.permute.xlu0 %864
      %v870 = vsub.f32 %v852, %v859
      %v871 = vsub.f32 %v852, %v861
      %v872 = vsub.f32 %v852, %v863
      %v873 = vsub.f32 %v852, %v865
      %v874 = vmul.f32 %v870, %v870
      %v875 = vmul.f32 %v871, %v871
      %v876 = vmul.f32 %v872, %v872
      %v877 = vmul.f32 %v873, %v873
      %v878 = vsel %vm728, %v874, 0.0
      %879 = vadd.xlane.f32.xlu0 %v878
      %v880 = vpop.xlane.xlu0 %879
      %v881 = vsel %vm728, %v875, 0.0
      %882 = vadd.xlane.f32.xlu0 %v881
      %v883 = vpop.xlane.xlu0 %882
      %v884 = vsel %vm728, %v876, 0.0
      %885 = vadd.xlane.f32.xlu0 %v884
      %v886 = vpop.xlane.xlu0 %885
      %v887 = vsel %vm728, %v877, 0.0
      %888 = vadd.xlane.f32.xlu0 %v887
      %v889 = vpop.xlane.xlu0 %888
      %v890 = vrsqrt.pop %v880
      %v891 = vrsqrt.pop %v883
      %v892 = vrsqrt.pop %v886
      %v893 = vrsqrt.pop %v889
      %v894 = vmul.f32 %v870, %v890
      %v895 = vmul.f32 %v871, %v891
      %v896 = vmul.f32 %v872, %v892
      %v897 = vmul.f32 %v873, %v893
      %898 = vrot.lane.b32.xlu0 %v418, 16
      %v899 = vpop.permute.xlu0 %898
      %900 = vrot.lane.b32.xlu0 %v419, 16
      %v901 = vpop.permute.xlu0 %900
      %902 = vrot.lane.b32.xlu0 %v420, 16
      %v903 = vpop.permute.xlu0 %902
      %904 = vrot.lane.b32.xlu0 %v421, 16
      %v905 = vpop.permute.xlu0 %904
      %914 = vrot.lane.b32.xlu0 %v894, 32
      %v915 = vpop.permute.xlu0 %914
      %916 = vrot.lane.b32.xlu0 %v895, 32
      %v917 = vpop.permute.xlu0 %916
      %918 = vrot.lane.b32.xlu0 %v896, 32
      %v919 = vpop.permute.xlu0 %918
      %920 = vrot.lane.b32.xlu0 %v897, 32
      %v921 = vpop.permute.xlu0 %920
      %926 = vrot.lane.b32.xlu0 %v418, 19
      %v927 = vpop.permute.xlu0 %926
      %928 = vrot.lane.b32.xlu0 %v419, 19
      %v929 = vpop.permute.xlu0 %928
      %930 = vrot.lane.b32.xlu0 %v420, 19
      %v931 = vpop.permute.xlu0 %930
      %932 = vrot.lane.b32.xlu0 %v421, 19
      %v933 = vpop.permute.xlu0 %932
      %v938 = vsel %vm439, %v650, %v899
      %v939 = vsel %vm439, %v653, %v901
      %v940 = vsel %vm439, %v658, %v903
      %v941 = vsel %vm439, %v661, %v905
      %v942 = vsel %vm524, %v938, %v915
      %v943 = vsel %vm524, %v939, %v917
      %v944 = vsel %vm524, %v940, %v919
      %v945 = vsel %vm524, %v941, %v921
      %vm946 = vcmask 285696
      %v947 = vsel %vm946, %v942, %v927
      %v948 = vsel %vm946, %v943, %v929
      %v949 = vsel %vm946, %v944, %v931
      %v950 = vsel %vm946, %v945, %v933
      %v951 = vpack.c.bf16 %v948, %v947
      %v952 = vpack.c.bf16 %v950, %v949
      %v953 = vld [vmem:[%s8] sm:$0xf]
      %v954 = vld [vmem:[%s8 + $0x4] sm:$0xf]
      %v955 = vld [vmem:[%s8 + $0x8] sm:$0xf]
      %v956 = vld [vmem:[%s8 + $0xc] sm:$0xf]
      %v957 = vld [vmem:[%s8 + $0x10] sm:$0x7]
      %v958 = vld [vmem:[%s9] sm:$0x1]
      %v960 = vlaneseq
      %v961 = vshrl.u32 %v960, 7
      %v962 = vsub.s32 0, %v961
      %v963 = vrot.slane %v958, %v962
      %v970 = vunpack.c.l.b16 %v953
      %v971 = vunpack.c.l.b16 %v954
      %v972 = vunpack.c.l.b16 %v955
      %v973 = vunpack.c.l.b16 %v956
      %v974 = vunpack.c.l.b16 %v957
      %v975 = vpack.c.b16 %v971, %v970
      %v976 = vpack.c.b16 %v973, %v972
      %v977 = vpack.c.b16 %v974, %v974
      %vm980 = vcmask 310272
      %v982 = vsel %vm980, %v951, 0
      %v985 = vsel %vm980, %v952, 0
      %vm987 = vcmask 1042432
      %v989 = vsel %vm987, %v977, 0
      %991 = vmatprep.subr.bf16.mxu0 0
      %992 = vmatpush1.bf16.msra.mxu0 %v975
      %993 = vmatprep.subr.bf16.mxu0 0
      %994 = vmatpush1.bf16.msra.mxu0 %v976
      %995 = vmatprep.subr.bf16.mxu0 0
      %996 = vmatpush1.bf16.msra.mxu0 %v989
      %997 = vmatprep.subr.bf16.mxu0 0
      %998 = vmatpush1.bf16.msra.mxu0 0
      %999 = vmatprep.subr.bf16.mxu0 0
      %1000 = vmatpush1.bf16.msra.mxu0 0
      %1001 = vmatprep.subr.bf16.mxu0 0
      %1002 = vmatpush1.bf16.msra.mxu0 0
      %1003 = vmatprep.subr.bf16.mxu0 0
      %1004 = vmatpush1.bf16.msra.mxu0 0
      %1005 = vmatprep.subr.bf16.mxu0 0
      %1006 = vmatpush1.bf16.msra.mxu0 0
      %1007 = vmatprep.subr.bf16.mxu0 0
      %1008 = vmatpush1.bf16.msra.mxu0 0
      %1009 = vmatprep.subr.bf16.mxu0 0
      %1010 = vmatpush1.bf16.msra.mxu0 0
      %1011 = vmatprep.subr.bf16.mxu0 0
      %1012 = vmatpush1.bf16.msra.mxu0 0
      %1013 = vmatprep.subr.bf16.mxu0 0
      %1014 = vmatpush1.bf16.msra.mxu0 0
      %1015 = vmatprep.subr.bf16.mxu0 0
      %1016 = vmatpush1.bf16.msra.mxu0 0
      %1017 = vmatprep.subr.bf16.mxu0 0
      %1018 = vmatpush1.bf16.msra.mxu0 0
      %1019 = vmatprep.subr.bf16.mxu0 0
      %1020 = vmatpush1.bf16.msra.mxu0 0
      %1021 = vmatprep.subr.bf16.mxu0 0
      %1022 = vmatpush1.bf16.msra.mxu0 0
      %1023 = vmatprep.mubr.bf16.mxu0 0
      %1024 = vmatmul.mubr.bf16.gmra.mrb[0].mxu0 %v982
      %v1025 = vpop.f32.mrb[0].mxu0
      %v1026 = vadd.f32 %v963, %v1025
      %v1027 = vpop.f32.mrb[0].mxu0
      %v1028 = vpop.f32.mrb[0].mxu0
      %v1029 = vadd.f32 %v963, %v1028
      %v1030 = vpop.f32.mrb[0].mxu0
      %1031 = vmatprep.mubr.bf16.mxu0 0
      %1032 = vmatmul.mubr.bf16.gmra.mrb[0].mxu0 %v985
      %v1033 = vpop.f32.mrb[0].mxu0
      %v1034 = vadd.f32 %v963, %v1033
      %v1035 = vpop.f32.mrb[0].mxu0
      %v1036 = vpop.f32.mrb[0].mxu0
      %v1037 = vadd.f32 %v963, %v1036
      %v1038 = vpop.f32.mrb[0].mxu0
      %1039 = vdwg.mxu0
      %v1040 = vmax.f32 %v1026, 0.0
      %v1041 = vmax.f32 %v1029, 0.0
      %v1042 = vmax.f32 %v1034, 0.0
      %v1043 = vmax.f32 %v1037, 0.0
      %v1044 = vpack.c.bf16 %v1041, %v1040
      %v1045 = vpack.c.bf16 %v1043, %v1042
      %v1046 = vld [vmem:[%s10] sm:$0xf]
      %v1047 = vld [vmem:[%s10 + $0x4] sm:$0xf]
      %v1048 = vld [vmem:[%s10 + $0x8] sm:$0xf]
      %v1049 = vld [vmem:[%s10 + $0xc] sm:$0xf]
      %v1050 = vld [vmem:[%s10 + $0x10] sm:$0xf]
      %v1051 = vld [vmem:[%s10 + $0x14] sm:$0xf]
      %v1052 = vld [vmem:[%s10 + $0x18] sm:$0xf]
      %v1053 = vld [vmem:[%s10 + $0x1c] sm:$0xf]
      %v1054 = vld [vmem:[%s10 + $0x20] sm:$0xf]
      %v1055 = vld [vmem:[%s10 + $0x24] sm:$0xf]
      %v1056 = vld [vmem:[%s10 + $0x28] sm:$0xf]
      %v1057 = vld [vmem:[%s10 + $0x2c] sm:$0xf]
      %v1058 = vld [vmem:[%s10 + $0x30] sm:$0xf]
      %v1059 = vld [vmem:[%s10 + $0x34] sm:$0xf]
      %v1060 = vld [vmem:[%s10 + $0x38] sm:$0xf]
      %v1061 = vld [vmem:[%s10 + $0x3c] sm:$0xf]
      %v1062 = vld [vmem:[%s11] sm:$0x1]
      %v1064 = vlaneseq
      %v1065 = vshrl.u32 %v1064, 7
      %v1066 = vsub.s32 0, %v1065
      %v1067 = vrot.slane %v1062, %v1066
      %v1085 = vunpack.c.l.b16 %v1046
      %v1086 = vunpack.c.l.b16 %v1047
      %v1087 = vunpack.c.l.b16 %v1048
      %v1088 = vunpack.c.l.b16 %v1049
      %v1089 = vunpack.c.l.b16 %v1050
      %v1090 = vunpack.c.l.b16 %v1051
      %v1091 = vunpack.c.l.b16 %v1052
      %v1092 = vunpack.c.l.b16 %v1053
      %v1093 = vunpack.c.l.b16 %v1054
      %v1094 = vunpack.c.l.b16 %v1055
      %v1095 = vunpack.c.l.b16 %v1056
      %v1096 = vunpack.c.l.b16 %v1057
      %v1097 = vunpack.c.l.b16 %v1058
      %v1098 = vunpack.c.l.b16 %v1059
      %v1099 = vunpack.c.l.b16 %v1060
      %v1100 = vunpack.c.l.b16 %v1061
      %v1101 = vpack.c.b16 %v1086, %v1085
      %v1102 = vpack.c.b16 %v1088, %v1087
      %v1103 = vpack.c.b16 %v1090, %v1089
      %v1104 = vpack.c.b16 %v1092, %v1091
      %v1105 = vpack.c.b16 %v1094, %v1093
      %v1106 = vpack.c.b16 %v1096, %v1095
      %v1107 = vpack.c.b16 %v1098, %v1097
      %v1108 = vpack.c.b16 %v1100, %v1099
      %1117 = vmatprep.subr.bf16.mxu0 0
      %1118 = vmatpush1.bf16.msra.mxu0 %v1101
      %1119 = vmatprep.subr.bf16.mxu0 0
      %1120 = vmatpush1.bf16.msra.mxu0 %v1102
      %1121 = vmatprep.subr.bf16.mxu0 0
      %1122 = vmatpush1.bf16.msra.mxu0 %v1103
      %1123 = vmatprep.subr.bf16.mxu0 0
      %1124 = vmatpush1.bf16.msra.mxu0 %v1104
      %1125 = vmatprep.subr.bf16.mxu0 0
      %1126 = vmatpush1.bf16.msra.mxu0 %v1105
      %1127 = vmatprep.subr.bf16.mxu0 0
      %1128 = vmatpush1.bf16.msra.mxu0 %v1106
      %1129 = vmatprep.subr.bf16.mxu0 0
      %1130 = vmatpush1.bf16.msra.mxu0 %v1107
      %1131 = vmatprep.subr.bf16.mxu0 0
      %1132 = vmatpush1.bf16.msra.mxu0 %v1108
      %1133 = vmatprep.subr.bf16.mxu0 0
      %1134 = vmatpush1.bf16.msra.mxu0 0
      %1135 = vmatprep.subr.bf16.mxu0 0
      %1136 = vmatpush1.bf16.msra.mxu0 0
      %1137 = vmatprep.subr.bf16.mxu0 0
      %1138 = vmatpush1.bf16.msra.mxu0 0
      %1139 = vmatprep.subr.bf16.mxu0 0
      %1140 = vmatpush1.bf16.msra.mxu0 0
      %1141 = vmatprep.subr.bf16.mxu0 0
      %1142 = vmatpush1.bf16.msra.mxu0 0
      %1143 = vmatprep.subr.bf16.mxu0 0
      %1144 = vmatpush1.bf16.msra.mxu0 0
      %1145 = vmatprep.subr.bf16.mxu0 0
      %1146 = vmatpush1.bf16.msra.mxu0 0
      %1147 = vmatprep.subr.bf16.mxu0 0
      %1148 = vmatpush1.bf16.msra.mxu0 0
      %1149 = vmatprep.mubr.bf16.mxu0 0
      %1150 = vmatmul.mubr.bf16.gmra.mrb[0].mxu0 %v1044
      %v1151 = vpop.f32.mrb[0].mxu0
      %v1152 = vadd.f32 %v1067, %v1151
      %v1153 = vpop.f32.mrb[0].mxu0
      %v1154 = vpop.f32.mrb[0].mxu0
      %v1155 = vadd.f32 %v1067, %v1154
      %v1156 = vpop.f32.mrb[0].mxu0
      %1157 = vmatprep.mubr.bf16.mxu0 0
      %1158 = vmatmul.mubr.bf16.gmra.mrb[0].mxu0 %v1045
      %v1159 = vpop.f32.mrb[0].mxu0
      %v1160 = vadd.f32 %v1067, %v1159
      %v1161 = vpop.f32.mrb[0].mxu0
      %v1162 = vpop.f32.mrb[0].mxu0
      %v1163 = vadd.f32 %v1067, %v1162
      %v1164 = vpop.f32.mrb[0].mxu0
      %1165 = vdwg.mxu0
      %v1166 = vxor.u32 %v1152, 2147483648
      %v1167 = vxor.u32 %v1155, 2147483648
      %v1168 = vxor.u32 %v1160, 2147483648
      %v1169 = vxor.u32 %v1163, 2147483648
      %v1170 = vmul.f32 %v1166, 1.442695
      %v1171 = vpow.pop %v1170
      %v1172 = vmul.f32 %v1167, 1.442695
      %v1173 = vpow.pop %v1172
      %v1174 = vmul.f32 %v1168, 1.442695
      %v1175 = vpow.pop %v1174
      %v1176 = vmul.f32 %v1169, 1.442695
      %v1177 = vpow.pop %v1176
      %v1178 = vadd.f32 %v1171, 1.0
      %v1179 = vadd.f32 %v1173, 1.0
      %v1180 = vadd.f32 %v1175, 1.0
      %v1181 = vadd.f32 %v1177, 1.0
      %v1182 = vrcp.pop %v1178
      %v1183 = vmul.f32 1.0, %v1182
      %v1184 = vrcp.pop %v1179
      %v1185 = vmul.f32 1.0, %v1184
      %v1186 = vrcp.pop %v1180
      %v1187 = vmul.f32 1.0, %v1186
      %v1188 = vrcp.pop %v1181
      %v1189 = vmul.f32 1.0, %v1188
      %1190 = vrot.lane.b32.xlu0 %v664, 94
      %v1191 = vpop.permute.xlu0 %1190
      %1192 = vrot.lane.b32.xlu0 %v665, 94
      %v1193 = vpop.permute.xlu0 %1192
      %1194 = vrot.lane.b32.xlu0 %v666, 94
      %v1195 = vpop.permute.xlu0 %1194
      %1196 = vrot.lane.b32.xlu0 %v667, 94
      %v1197 = vpop.permute.xlu0 %1196
      %1202 = vrot.lane.b32.xlu0 %v664, 97
      %v1203 = vpop.permute.xlu0 %1202
      %1204 = vrot.lane.b32.xlu0 %v665, 97
      %v1205 = vpop.permute.xlu0 %1204
      %1206 = vrot.lane.b32.xlu0 %v666, 97
      %v1207 = vpop.permute.xlu0 %1206
      %1208 = vrot.lane.b32.xlu0 %v667, 97
      %v1209 = vpop.permute.xlu0 %1208
      %1214 = vrot.lane.b32.xlu0 %v664, 100
      %v1215 = vpop.permute.xlu0 %1214
      %1216 = vrot.lane.b32.xlu0 %v665, 100
      %v1217 = vpop.permute.xlu0 %1216
      %1218 = vrot.lane.b32.xlu0 %v666, 100
      %v1219 = vpop.permute.xlu0 %1218
      %1220 = vrot.lane.b32.xlu0 %v667, 100
      %v1221 = vpop.permute.xlu0 %1220
      %1226 = vrot.lane.b32.xlu0 %v664, 103
      %v1227 = vpop.permute.xlu0 %1226
      %1228 = vrot.lane.b32.xlu0 %v665, 103
      %v1229 = vpop.permute.xlu0 %1228
      %1230 = vrot.lane.b32.xlu0 %v666, 103
      %v1231 = vpop.permute.xlu0 %1230
      %1232 = vrot.lane.b32.xlu0 %v667, 103
      %v1233 = vpop.permute.xlu0 %1232
      %v1238 = vsel %vm728, %v1191, %v1203
      %v1239 = vsel %vm728, %v1193, %v1205
      %v1240 = vsel %vm728, %v1195, %v1207
      %v1241 = vsel %vm728, %v1197, %v1209
      %v1242 = vsel %vm733, %v1238, %v1215
      %v1243 = vsel %vm733, %v1239, %v1217
      %v1244 = vsel %vm733, %v1240, %v1219
      %v1245 = vsel %vm733, %v1241, %v1221
      %v1246 = vsel %vm738, %v1242, %v1227
      %v1247 = vsel %vm738, %v1243, %v1229
      %v1248 = vsel %vm738, %v1244, %v1231
      %v1249 = vsel %vm738, %v1245, %v1233
      %v1250 = vmul.f32 %v1183, %v1246
      %v1251 = vmul.f32 %v1185, %v1247
      %v1252 = vmul.f32 %v1187, %v1248
      %v1253 = vmul.f32 %v1189, %v1249
      %v1254 = vadd.f32 %v418, 1e-06
      %v1255 = vadd.f32 %v419, 1e-06
      %v1256 = vadd.f32 %v420, 1e-06
      %v1257 = vadd.f32 %v421, 1e-06
      %1259 = vset.pattern.permute.xlu0 37
      %1260 = vperm.xlu0 %1259, %v1254
      %v1261 = vpop.permute.xlu0 %1260
      %1264 = vset.pattern.permute.xlu0 37
      %1265 = vperm.xlu0 %1264, %v1255
      %v1266 = vpop.permute.xlu0 %1265
      %1269 = vset.pattern.permute.xlu0 37
      %1270 = vperm.xlu0 %1269, %v1256
      %v1271 = vpop.permute.xlu0 %1270
      %1274 = vset.pattern.permute.xlu0 37
      %1275 = vperm.xlu0 %1274, %v1257
      %v1276 = vpop.permute.xlu0 %1275
      %v1278 = vrcp.pop %v1261
      %v1279 = vmul.f32 %v1183, %v1278
      %v1280 = vrcp.pop %v1266
      %v1281 = vmul.f32 %v1185, %v1280
      %v1282 = vrcp.pop %v1271
      %v1283 = vmul.f32 %v1187, %v1282
      %v1284 = vrcp.pop %v1276
      %v1285 = vmul.f32 %v1189, %v1284
      %v1286 = vsub.f32 0.0, %v1279
      %v1287 = vsub.f32 0.0, %v1281
      %v1288 = vsub.f32 0.0, %v1283
      %v1289 = vsub.f32 0.0, %v1285
      %v1290 = vmul.f32 %v1286, 1.442695
      %v1291 = vpow.pop %v1290
      %v1292 = vmul.f32 %v1287, 1.442695
      %v1293 = vpow.pop %v1292
      %v1294 = vmul.f32 %v1288, 1.442695
      %v1295 = vpow.pop %v1294
      %v1296 = vmul.f32 %v1289, 1.442695
      %v1297 = vpow.pop %v1296
      %v1298 = vsub.f32 1.0, %v1291
      %v1299 = vsub.f32 1.0, %v1293
      %v1300 = vsub.f32 1.0, %v1295
      %v1301 = vsub.f32 1.0, %v1297
      %v1302 = vsub.f32 %v1183, 0.5
      %v1303 = vsub.f32 %v1185, 0.5
      %v1304 = vsub.f32 %v1187, 0.5
      %v1305 = vsub.f32 %v1189, 0.5
      %v1306 = vmul.f32 %v1302, 3.5449078
      %v1307 = vmul.f32 %v1303, 3.5449078
      %v1308 = vmul.f32 %v1304, 3.5449078
      %v1309 = vmul.f32 %v1305, 3.5449078
      %1310 = vst.msk [vmem:[%s415] sm:$0xff] %vm439, %v650
      %1311 = vst.msk [vmem:[%s415 + $0x8] sm:$0xff] %vm439, %v653
      %1312 = vst.msk [vmem:[%s415 + $0x10] sm:$0xff] %vm439, %v658
      %1313 = vst.msk [vmem:[%s415 + $0x18] sm:$0xff] %vm439, %v661
      %vm1314 = vcmask 261248
      %1315 = vst.msk [vmem:[%s415] sm:$0xff] %vm1314, %v899
      %1316 = vst.msk [vmem:[%s415 + $0x8] sm:$0xff] %vm1314, %v901
      %1317 = vst.msk [vmem:[%s415 + $0x10] sm:$0xff] %vm1314, %v903
      %1318 = vst.msk [vmem:[%s415 + $0x18] sm:$0xff] %vm1314, %v905
      %1319 = vrot.lane.b32.xlu0 %v664, 16
      %v1320 = vpop.permute.xlu0 %1319
      %1321 = vrot.lane.b32.xlu0 %v665, 16
      %v1322 = vpop.permute.xlu0 %1321
      %1323 = vrot.lane.b32.xlu0 %v666, 16
      %v1324 = vpop.permute.xlu0 %1323
      %1325 = vrot.lane.b32.xlu0 %v667, 16
      %v1326 = vpop.permute.xlu0 %1325
      %vm1331 = vcmask 433408
      %1332 = vst.msk [vmem:[%s415] sm:$0xff] %vm1331, %v1320
      %1333 = vst.msk [vmem:[%s415 + $0x8] sm:$0xff] %vm1331, %v1322
      %1334 = vst.msk [vmem:[%s415 + $0x10] sm:$0xff] %vm1331, %v1324
      %1335 = vst.msk [vmem:[%s415 + $0x18] sm:$0xff] %vm1331, %v1326
      %1340 = vrot.lane.b32.xlu0 %v843, 53
      %v1341 = vpop.permute.xlu0 %1340
      %1342 = vrot.lane.b32.xlu0 %v844, 53
      %v1343 = vpop.permute.xlu0 %1342
      %1344 = vrot.lane.b32.xlu0 %v845, 53
      %v1345 = vpop.permute.xlu0 %1344
      %1346 = vrot.lane.b32.xlu0 %v846, 53
      %v1347 = vpop.permute.xlu0 %1346
      %vm1352 = vcmask 531880
      %1353 = vst.msk [vmem:[%s415] sm:$0xff] %vm1352, %v1341
      %1354 = vst.msk [vmem:[%s415 + $0x8] sm:$0xff] %vm1352, %v1343
      %1355 = vst.msk [vmem:[%s415 + $0x10] sm:$0xff] %vm1352, %v1345
      %1356 = vst.msk [vmem:[%s415 + $0x18] sm:$0xff] %vm1352, %v1347
      %1361 = vrot.lane.b32.xlu0 %v1250, 65
      %v1362 = vpop.permute.xlu0 %1361
      %1363 = vrot.lane.b32.xlu0 %v1251, 65
      %v1364 = vpop.permute.xlu0 %1363
      %1365 = vrot.lane.b32.xlu0 %v1252, 65
      %v1366 = vpop.permute.xlu0 %1365
      %1367 = vrot.lane.b32.xlu0 %v1253, 65
      %v1368 = vpop.permute.xlu0 %1367
      %vm1373 = vcmask 630280
      %1374 = vst.msk [vmem:[%s415] sm:$0xff] %vm1373, %v1362
      %1375 = vst.msk [vmem:[%s415 + $0x8] sm:$0xff] %vm1373, %v1364
      %1376 = vst.msk [vmem:[%s415 + $0x10] sm:$0xff] %vm1373, %v1366
      %1377 = vst.msk [vmem:[%s415 + $0x18] sm:$0xff] %vm1373, %v1368
      %1382 = vrot.lane.b32.xlu0 %v1298, 65
      %v1383 = vpop.permute.xlu0 %1382
      %1384 = vrot.lane.b32.xlu0 %v1299, 65
      %v1385 = vpop.permute.xlu0 %1384
      %1386 = vrot.lane.b32.xlu0 %v1300, 65
      %v1387 = vpop.permute.xlu0 %1386
      %1388 = vrot.lane.b32.xlu0 %v1301, 65
      %v1389 = vpop.permute.xlu0 %1388
      %vm1394 = vcmask 663144
      %1395 = vst.msk [vmem:[%s415] sm:$0xff] %vm1394, %v1383
      %1396 = vst.msk [vmem:[%s415 + $0x8] sm:$0xff] %vm1394, %v1385
      %1397 = vst.msk [vmem:[%s415 + $0x10] sm:$0xff] %vm1394, %v1387
      %1398 = vst.msk [vmem:[%s415 + $0x18] sm:$0xff] %vm1394, %v1389
      %1403 = vrot.lane.b32.xlu0 %v1306, 65
      %v1404 = vpop.permute.xlu0 %1403
      %1405 = vrot.lane.b32.xlu0 %v1307, 65
      %v1406 = vpop.permute.xlu0 %1405
      %1407 = vrot.lane.b32.xlu0 %v1308, 65
      %v1408 = vpop.permute.xlu0 %1407
      %1409 = vrot.lane.b32.xlu0 %v1309, 65
      %v1410 = vpop.permute.xlu0 %1409
      %vm1415 = vcmask 761480
      %1416 = vst.msk [vmem:[%s415] sm:$0xff] %vm1415, %v1404
      %1417 = vst.msk [vmem:[%s415 + $0x8] sm:$0xff] %vm1415, %v1406
      %1418 = vst.msk [vmem:[%s415 + $0x10] sm:$0xff] %vm1415, %v1408
      %1419 = vst.msk [vmem:[%s415 + $0x18] sm:$0xff] %vm1415, %v1410
      %1424 = vrot.lane.b32.xlu0 %v1152, 65
      %v1425 = vpop.permute.xlu0 %1424
      %1426 = vrot.lane.b32.xlu0 %v1155, 65
      %v1427 = vpop.permute.xlu0 %1426
      %1428 = vrot.lane.b32.xlu0 %v1160, 65
      %v1429 = vpop.permute.xlu0 %1428
      %1430 = vrot.lane.b32.xlu0 %v1163, 65
      %v1431 = vpop.permute.xlu0 %1430
      %vm1436 = vcmask 1048296
      %1437 = vst.msk [vmem:[%s415] sm:$0xff] %vm1436, %v1425
      %1438 = vst.msk [vmem:[%s415 + $0x8] sm:$0xff] %vm1436, %v1427
      %1439 = vst.msk [vmem:[%s415 + $0x10] sm:$0xff] %vm1436, %v1429
      %1440 = vst.msk [vmem:[%s415 + $0x18] sm:$0xff] %vm1436, %v1431
      %s1441 = smul.u32 4, %s23
      %p1442 = scmp.lt.s32.totalorder %s1441, 7
      %s1443 = scalar_select %p1442, %s1441, 7
      %s1444 = smul.addr %s1443, 8
      %s1445 = scalar_lea.vmem %s12, %s1444
      // Predicated region
      $region69: #{_decaf_forward.1} parent=67 // pred_check
        %p1446 = pneg %p298
      $region70: #{_decaf_forward.1} parent=67 // pred_check_branch
        %1448 = sbr.rel (%p1446) target = $region72
      $region71: #{_decaf_forward.1} parent=67 // pred_region
        %s1449 = smul.u32 4, %s23
      $region72: #{_decaf_forward.1} parent=67 // pred_fallthru
        _
    $region68: #{_decaf_forward.1} parent=5 // pred_fallthru
      _
    %p1450 = scmp.le.s32.totalorder 2, %s18
    // Predicated region
    $region73: #{_decaf_forward.1} parent=5 // pred_check
      %p1451 = pneg %p1450
    $region74: #{_decaf_forward.1} parent=5 // pred_check_branch
      %1453 = sbr.rel (%p1451) target = $region76
    $region75: #{_decaf_forward.1} parent=5 // pred_region
      %s1454 = ssub.s32 %s18, 2
      // Predicated region
      $region77: #{_decaf_forward.1} parent=75 // pred_check
        %p1455 = pneg %p304
      $region78: #{_decaf_forward.1} parent=75 // pred_check_branch
        %1457 = sbr.rel (%p1455) target = $region80
      $region79: #{_decaf_forward.1} parent=75 // pred_region
        %s1458 = smul.u32 4, %s24
        %p1459 = scmp.lt.s32.totalorder %s1458, 7
        %s1460 = scalar_select %p1459, %s1458, 7
        %s1461 = smul.addr %s1460, 8
        %s1462 = scalar_lea.vmem %s12, %s1461
      $region80: #{_decaf_forward.1} parent=75 // pred_fallthru
        _
    $region76: #{_decaf_forward.1} parent=5 // pred_fallthru
      _
  $region6: #{_decaf_forward.1} parent=0 // loop_footer
    %s22 = sadd.s32 1, %s18
  $region7: #{_decaf_forward.1} parent=0 // loop_footer_branch
    %17 = sbr.rel target = $region3
  $region8: #{_decaf_forward.1} parent=0 // loop_exit
    _

</llo_original>
